<compile_context>
chip_gen: v7x
topology: tpu7x:2x2x1
jax: 0.10.0
libtpu: 0.0.40
codegen_flags: <defaults>
</compile_context>

<pallas_src>
import jax
import jax.numpy as jnp
from jax.experimental import pallas as pl
from jax.experimental.pallas import tpu as pltpu


# ------------------------------ Pallas kernels ------------------------------
def _conv_lrelu_kernel(w_ref, p_ref, b_ref, o_ref):
    # out_T = W (Cout, K) @ patches_T (K, M); lane axis = M (lane-dense).
    x = jnp.dot(w_ref[...], p_ref[...], preferred_element_type=jnp.float32)
    x = x + b_ref[...]                              # (Cout, 1) broadcast over lanes
    x = jnp.where(x > 0, x, 0.2 * x)                # LeakyReLU(0.2)
    o_ref[...] = x.astype(o_ref.dtype)


def _conv_bn_lrelu_kernel(w_ref, p_ref, g_ref, bt_ref, o_ref):
    x = jnp.dot(w_ref[...], p_ref[...], preferred_element_type=jnp.float32)
    # Training-mode BatchNorm2d: batch stats over (N, H, W) == the lane axis.
    # Conv bias omitted: it cancels exactly against the mean subtraction.
    mean = jnp.mean(x, axis=1, keepdims=True)
    var = jnp.mean(jnp.square(x - mean), axis=1, keepdims=True)
    x = (x - mean) * jax.lax.rsqrt(var + 1e-5)
    x = x * g_ref[...] + bt_ref[...]
    x = jnp.where(x > 0, x, 0.2 * x)
    o_ref[...] = x.astype(o_ref.dtype)


def _conv_bn_lrelu_head_kernel(w3_ref, p_ref, g_ref, bt_ref,
                               w4_ref, b4_ref, sel_ref, o_ref):
    # Fused conv3 + BN3 + LeakyReLU + conv4 + sigmoid.
    x = jnp.dot(w3_ref[...], p_ref[...], preferred_element_type=jnp.float32)  # (C3, M3)
    mean = jnp.mean(x, axis=1, keepdims=True)
    var = jnp.mean(jnp.square(x - mean), axis=1, keepdims=True)
    x = (x - mean) * jax.lax.rsqrt(var + 1e-5)
    x = x * g_ref[...] + bt_ref[...]
    x = jnp.where(x > 0, x, 0.2 * x)
    # conv4: w4_ref is w4 flattened (c, ky, kx) tiled across the batch columns;
    # sel_ref (M3, N) sums the 16 spatial columns belonging to each image.
    t = jnp.sum(x * w4_ref[...], axis=0, keepdims=True)                  # (1, M3)
    y = jnp.dot(t, sel_ref[...], preferred_element_type=jnp.float32)     # (1, N)
    y = y + b4_ref[...]
    o_ref[...] = pl.reciprocal(1.0 + jnp.exp(-y), approx=True)           # sigmoid


def _call(kernel, out_shape, *args):
    # No grid, no blocking: every operand whole in VMEM (no double-buffering).
    return pl.pallas_call(
        kernel,
        out_shape=out_shape,
        in_specs=[pl.BlockSpec(memory_space=pltpu.MemorySpace.VMEM) for _ in args],
        out_specs=pl.BlockSpec(memory_space=pltpu.MemorySpace.VMEM),
    )(*args)


# -------------------------------- JAX glue ----------------------------------
def im2col_T(x, kh, kw, stride, pad):
    """x: (C, N, H, W) channel-major -> patches_T (C*KH*KW, N*OH*OW).

    Row order (c, ky, kx) matches PyTorch's w.reshape(Cout, Cin*KH*KW); column
    order (n, oy, ox).  No transposes of large tensors are needed because the
    input already has channels leading.
    """
    c, n, h, w = x.shape
    xp = jnp.pad(x, ((0, 0), (0, 0), (pad, pad), (pad, pad)))
    oh = (h + 2 * pad - kh) // stride + 1
    ow = (w + 2 * pad - kw) // stride + 1
    taps = [xp[:, :, ky:ky + stride * oh:stride, kx:kx + stride * ow:stride]
            for ky in range(kh) for kx in range(kw)]
    p = jnp.stack(taps, axis=1)                     # (C, KH*KW, N, OH, OW)
    return p.reshape(c * kh * kw, n * oh * ow), oh, ow


# ----------------------- discriminator (img_size=32) ------------------------
def init_params(key, d=16):
    """normal_init(mean=0, std=0.02); conv biases zero; BN gamma=1, beta=0."""
    ks = jax.random.split(key, 4)
    std = 0.02
    return {
        "w1": jax.random.normal(ks[0], (d, 1, 4, 4), jnp.float32) * std,
        "b1": jnp.zeros((d,), jnp.float32),
        "w2": jax.random.normal(ks[1], (2 * d, d, 4, 4), jnp.float32) * std,
        "b2": jnp.zeros((2 * d,), jnp.float32),      # unused: cancelled by BN2
        "g2": jnp.ones((2 * d,), jnp.float32),
        "bt2": jnp.zeros((2 * d,), jnp.float32),
        "w3": jax.random.normal(ks[2], (4 * d, 2 * d, 4, 4), jnp.float32) * std,
        "b3": jnp.zeros((4 * d,), jnp.float32),      # unused: cancelled by BN3
        "g3": jnp.ones((4 * d,), jnp.float32),
        "bt3": jnp.zeros((4 * d,), jnp.float32),
        "w4": jax.random.normal(ks[3], (1, 4 * d, 4, 4), jnp.float32) * std,
        "b4": jnp.zeros((1,), jnp.float32),
    }


def discriminator_forward(params, x):
    # x: (N, 1, 32, 32) NCHW float32, as in the PyTorch module.
    n = x.shape[0]
    d = params["w1"].shape[0]
    cdt = jnp.bfloat16  # MXU input dtype (f32 accumulation / epilogue in-kernel)

    # ---- conv1 + LeakyReLU -------------------------------------------------
    a = jnp.transpose(x, (1, 0, 2, 3)).astype(cdt)            # (1, N, 32, 32)
    p1, oh, ow = im2col_T(a, 4, 4, 2, 1)                      # (16, N*256)
    w1 = params["w1"].reshape(d, -1).astype(cdt)              # (d, 16)
    a1 = _call(_conv_lrelu_kernel,
               jax.ShapeDtypeStruct((d, n * oh * ow), cdt),
               w1, p1, params["b1"].reshape(d, 1))
    a1 = a1.reshape(d, n, oh, ow)                             # (d, N, 16, 16)

    # ---- conv2 + BN2 + LeakyReLU (bias dropped: cancelled by BN) ----------
    p2, oh, ow = im2col_T(a1, 4, 4, 2, 1)                     # (16d, N*64)
    w2 = params["w2"].reshape(2 * d, -1).astype(cdt)
    a2 = _call(_conv_bn_lrelu_kernel,
               jax.ShapeDtypeStruct((2 * d, n * oh * ow), cdt),
               w2, p2,
               params["g2"].reshape(2 * d, 1), params["bt2"].reshape(2 * d, 1))
    a2 = a2.reshape(2 * d, n, oh, ow)                         # (2d, N, 8, 8)

    # ---- conv3 + BN3 + LeakyReLU + conv4 + sigmoid (single fused kernel) --
    p3, oh, ow = im2col_T(a2, 4, 4, 2, 1)                     # (32d, N*16)
    w3 = params["w3"].reshape(4 * d, -1).astype(cdt)
    m3 = n * oh * ow
    w4t = jnp.tile(params["w4"].reshape(4 * d, oh * ow), (1, n))          # (4d, N*16) f32
    sel = (jnp.arange(m3)[:, None] // (oh * ow)
           == jnp.arange(n)[None, :]).astype(jnp.float32)                 # (N*16, N)
    out = _call(_conv_bn_lrelu_head_kernel,
                jax.ShapeDtypeStruct((1, n), jnp.float32),
                w3, p3,
                params["g3"].reshape(4 * d, 1), params["bt3"].reshape(4 * d, 1),
                w4t, params["b4"].reshape(1, 1), sel)
    return out.reshape(n, 1, 1, 1)
    # TODO(synk): eval-mode BatchNorm (running_mean/var) not modeled; this matches the
    # training-mode forward of a freshly constructed nn.Module.


if __name__ == "__main__":
    key = jax.random.PRNGKey(0)
    k_in, k_par = jax.random.split(key)
    # Small shapes consistent with the module: batch=2, 1 input channel,
    # img_size=32 (the 32-branch of the module), base width d=16.
    x = jax.random.normal(k_in, (2, 1, 32, 32), jnp.float32)
    params = init_params(k_par, d=16)

    out = jax.jit(discriminator_forward)(params, x)
    out = jax.block_until_ready(out)
    assert out.shape == (2, 1, 1, 1), out.shape
    assert bool(jnp.all(jnp.isfinite(out)))
    # approx reciprocal in the sigmoid -> allow a tiny tolerance on the bounds
    assert bool(jnp.all((out > -1e-3) & (out < 1.0 + 1e-3)))
    print("KERNEL_OK")
</pallas_src>

<mosaic_0001>
module attributes {stable_mosaic.version = 11 : i64} {
  func.func @_conv_lrelu_kernel(%arg0: memref<16x16xbf16, #tpu.memory_space<vmem>>, %arg1: memref<16x512xbf16, #tpu.memory_space<vmem>>, %arg2: memref<16x1xf32, #tpu.memory_space<vmem>>, %arg3: memref<16x512xbf16, #tpu.memory_space<vmem>>) attributes {dimension_semantics = [], scalar_prefetch = 0 : i64, scratch_operands = 0 : i64, tpu.core_type = #tpu.core_type<tc>} {
    %c0 = arith.constant 0 : index
    %c0_0 = arith.constant 0 : index
    %0 = vector.load %arg0[%c0, %c0_0] : memref<16x16xbf16, #tpu.memory_space<vmem>>, vector<16x16xbf16>
    %c0_1 = arith.constant 0 : index
    %c0_2 = arith.constant 0 : index
    %1 = vector.load %arg1[%c0_1, %c0_2] : memref<16x512xbf16, #tpu.memory_space<vmem>>, vector<16x512xbf16>
    %cst = arith.constant dense<0.000000e+00> : vector<16x512xf32>
    %2 = tpu.matmul %0, %1, %cst {dimension_numbers = #tpu.dot_dimension_numbers<[1], [0], [0], [1], [0, 0, 1, 1], [], []>} : vector<16x16xbf16>, vector<16x512xbf16>, vector<16x512xf32> -> vector<16x512xf32>
    %c0_3 = arith.constant 0 : index
    %c0_4 = arith.constant 0 : index
    %3 = vector.load %arg2[%c0_3, %c0_4] : memref<16x1xf32, #tpu.memory_space<vmem>>, vector<16x1xf32>
    %4 = vector.broadcast %3 : vector<16x1xf32> to vector<16x512xf32>
    %5 = arith.addf %2, %4 : vector<16x512xf32>
    %cst_5 = arith.constant 0.000000e+00 : f32
    %6 = vector.broadcast %cst_5 : f32 to vector<16x512xf32>
    %7 = arith.cmpf ogt, %5, %6 : vector<16x512xf32>
    %cst_6 = arith.constant 2.000000e-01 : f32
    %8 = vector.broadcast %cst_6 : f32 to vector<16x512xf32>
    %9 = arith.mulf %8, %5 : vector<16x512xf32>
    %10 = arith.select %7, %5, %9 : vector<16x512xi1>, vector<16x512xf32>
    %11 = arith.truncf %10 : vector<16x512xf32> to vector<16x512xbf16>
    %c0_7 = arith.constant 0 : index
    %c0_8 = arith.constant 0 : index
    %12 = vector.load %arg3[%c0_7, %c0_8] : memref<16x512xbf16, #tpu.memory_space<vmem>>, vector<16x512xbf16>
    tpu.vector_store %arg3[%c0_7, %c0_8], %11 {strides = array<i32>} : memref<16x512xbf16, #tpu.memory_space<vmem>>, vector<16x512xbf16>,
    return
  }
}

module attributes {stable_mosaic.version = 11 : i64} {
  func.func @_conv_bn_lrelu_kernel(%arg0: memref<32x256xbf16, #tpu.memory_space<vmem>>, %arg1: memref<256x128xbf16, #tpu.memory_space<vmem>>, %arg2: memref<32x1xf32, #tpu.memory_space<vmem>>, %arg3: memref<32x1xf32, #tpu.memory_space<vmem>>, %arg4: memref<32x128xbf16, #tpu.memory_space<vmem>>) attributes {dimension_semantics = [], scalar_prefetch = 0 : i64, scratch_operands = 0 : i64, tpu.core_type = #tpu.core_type<tc>} {
    %c0 = arith.constant 0 : index
    %c0_0 = arith.constant 0 : index
    %0 = vector.load %arg0[%c0, %c0_0] : memref<32x256xbf16, #tpu.memory_space<vmem>>, vector<32x256xbf16>
    %c0_1 = arith.constant 0 : index
    %c0_2 = arith.constant 0 : index
    %1 = vector.load %arg1[%c0_1, %c0_2] : memref<256x128xbf16, #tpu.memory_space<vmem>>, vector<256x128xbf16>
    %cst = arith.constant dense<0.000000e+00> : vector<32x128xf32>
    %2 = tpu.matmul %0, %1, %cst {dimension_numbers = #tpu.dot_dimension_numbers<[1], [0], [0], [1], [0, 0, 1, 1], [], []>} : vector<32x256xbf16>, vector<256x128xbf16>, vector<32x128xf32> -> vector<32x128xf32>
    %cst_3 = arith.constant dense<0.000000e+00> : vector<32xf32>
    %3 = vector.multi_reduction <add>, %2, %cst_3 [1] : vector<32x128xf32> to vector<32xf32>
    %4 = vector.shape_cast %3 : vector<32xf32> to vector<32x1xf32>
    %cst_4 = arith.constant 1.280000e+02 : f32
    %5 = vector.broadcast %cst_4 : f32 to vector<32x1xf32>
    %6 = arith.divf %4, %5 : vector<32x1xf32>
    %7 = vector.broadcast %6 : vector<32x1xf32> to vector<32x128xf32>
    %8 = arith.subf %2, %7 : vector<32x128xf32>
    %9 = arith.mulf %8, %8 : vector<32x128xf32>
    %cst_5 = arith.constant dense<0.000000e+00> : vector<32xf32>
    %10 = vector.multi_reduction <add>, %9, %cst_5 [1] : vector<32x128xf32> to vector<32xf32>
    %11 = vector.shape_cast %10 : vector<32xf32> to vector<32x1xf32>
    %cst_6 = arith.constant 1.280000e+02 : f32
    %12 = vector.broadcast %cst_6 : f32 to vector<32x1xf32>
    %13 = arith.divf %11, %12 : vector<32x1xf32>
    %14 = vector.broadcast %6 : vector<32x1xf32> to vector<32x128xf32>
    %15 = arith.subf %2, %14 : vector<32x128xf32>
    %cst_7 = arith.constant 9.99999974E-6 : f32
    %16 = vector.broadcast %cst_7 : f32 to vector<32x1xf32>
    %17 = arith.addf %13, %16 : vector<32x1xf32>
    %18 = math.rsqrt %17 : vector<32x1xf32>
    %19 = vector.broadcast %18 : vector<32x1xf32> to vector<32x128xf32>
    %20 = arith.mulf %15, %19 : vector<32x128xf32>
    %c0_8 = arith.constant 0 : index
    %c0_9 = arith.constant 0 : index
    %21 = vector.load %arg2[%c0_8, %c0_9] : memref<32x1xf32, #tpu.memory_space<vmem>>, vector<32x1xf32>
    %22 = vector.broadcast %21 : vector<32x1xf32> to vector<32x128xf32>
    %23 = arith.mulf %20, %22 : vector<32x128xf32>
    %c0_10 = arith.constant 0 : index
    %c0_11 = arith.constant 0 : index
    %24 = vector.load %arg3[%c0_10, %c0_11] : memref<32x1xf32, #tpu.memory_space<vmem>>, vector<32x1xf32>
    %25 = vector.broadcast %24 : vector<32x1xf32> to vector<32x128xf32>
    %26 = arith.addf %23, %25 : vector<32x128xf32>
    %cst_12 = arith.constant 0.000000e+00 : f32
    %27 = vector.broadcast %cst_12 : f32 to vector<32x128xf32>
    %28 = arith.cmpf ogt, %26, %27 : vector<32x128xf32>
    %cst_13 = arith.constant 2.000000e-01 : f32
    %29 = vector.broadcast %cst_13 : f32 to vector<32x128xf32>
    %30 = arith.mulf %29, %26 : vector<32x128xf32>
    %31 = arith.select %28, %26, %30 : vector<32x128xi1>, vector<32x128xf32>
    %32 = arith.truncf %31 : vector<32x128xf32> to vector<32x128xbf16>
    %c0_14 = arith.constant 0 : index
    %c0_15 = arith.constant 0 : index
    %33 = vector.load %arg4[%c0_14, %c0_15] : memref<32x128xbf16, #tpu.memory_space<vmem>>, vector<32x128xbf16>
    tpu.vector_store %arg4[%c0_14, %c0_15], %32 {strides = array<i32>} : memref<32x128xbf16, #tpu.memory_space<vmem>>, vector<32x128xbf16>,
    return
  }
}

module attributes {stable_mosaic.version = 11 : i64} {
  func.func @_conv_bn_lrelu_head_kernel(%arg0: memref<64x512xbf16, #tpu.memory_space<vmem>>, %arg1: memref<512x32xbf16, #tpu.memory_space<vmem>>, %arg2: memref<64x1xf32, #tpu.memory_space<vmem>>, %arg3: memref<64x1xf32, #tpu.memory_space<vmem>>, %arg4: memref<64x32xf32, #tpu.memory_space<vmem>>, %arg5: memref<1x1xf32, #tpu.memory_space<vmem>>, %arg6: memref<32x2xf32, #tpu.memory_space<vmem>>, %arg7: memref<1x2xf32, #tpu.memory_space<vmem>>) attributes {dimension_semantics = [], scalar_prefetch = 0 : i64, scratch_operands = 0 : i64, tpu.core_type = #tpu.core_type<tc>} {
    %c0 = arith.constant 0 : index
    %c0_0 = arith.constant 0 : index
    %0 = vector.load %arg0[%c0, %c0_0] : memref<64x512xbf16, #tpu.memory_space<vmem>>, vector<64x512xbf16>
    %c0_1 = arith.constant 0 : index
    %c0_2 = arith.constant 0 : index
    %1 = vector.load %arg1[%c0_1, %c0_2] : memref<512x32xbf16, #tpu.memory_space<vmem>>, vector<512x32xbf16>
    %cst = arith.constant dense<0.000000e+00> : vector<64x32xf32>
    %2 = tpu.matmul %0, %1, %cst {dimension_numbers = #tpu.dot_dimension_numbers<[1], [0], [0], [1], [0, 0, 1, 1], [], []>} : vector<64x512xbf16>, vector<512x32xbf16>, vector<64x32xf32> -> vector<64x32xf32>
    %cst_3 = arith.constant dense<0.000000e+00> : vector<64xf32>
    %3 = vector.multi_reduction <add>, %2, %cst_3 [1] : vector<64x32xf32> to vector<64xf32>
    %4 = vector.shape_cast %3 : vector<64xf32> to vector<64x1xf32>
    %cst_4 = arith.constant 3.200000e+01 : f32
    %5 = vector.broadcast %cst_4 : f32 to vector<64x1xf32>
    %6 = arith.divf %4, %5 : vector<64x1xf32>
    %7 = vector.broadcast %6 : vector<64x1xf32> to vector<64x32xf32>
    %8 = arith.subf %2, %7 : vector<64x32xf32>
    %9 = arith.mulf %8, %8 : vector<64x32xf32>
    %cst_5 = arith.constant dense<0.000000e+00> : vector<64xf32>
    %10 = vector.multi_reduction <add>, %9, %cst_5 [1] : vector<64x32xf32> to vector<64xf32>
    %11 = vector.shape_cast %10 : vector<64xf32> to vector<64x1xf32>
    %cst_6 = arith.constant 3.200000e+01 : f32
    %12 = vector.broadcast %cst_6 : f32 to vector<64x1xf32>
    %13 = arith.divf %11, %12 : vector<64x1xf32>
    %14 = vector.broadcast %6 : vector<64x1xf32> to vector<64x32xf32>
    %15 = arith.subf %2, %14 : vector<64x32xf32>
    %cst_7 = arith.constant 9.99999974E-6 : f32
    %16 = vector.broadcast %cst_7 : f32 to vector<64x1xf32>
    %17 = arith.addf %13, %16 : vector<64x1xf32>
    %18 = math.rsqrt %17 : vector<64x1xf32>
    %19 = vector.broadcast %18 : vector<64x1xf32> to vector<64x32xf32>
    %20 = arith.mulf %15, %19 : vector<64x32xf32>
    %c0_8 = arith.constant 0 : index
    %c0_9 = arith.constant 0 : index
    %21 = vector.load %arg2[%c0_8, %c0_9] : memref<64x1xf32, #tpu.memory_space<vmem>>, vector<64x1xf32>
    %22 = vector.broadcast %21 : vector<64x1xf32> to vector<64x32xf32>
    %23 = arith.mulf %20, %22 : vector<64x32xf32>
    %c0_10 = arith.constant 0 : index
    %c0_11 = arith.constant 0 : index
    %24 = vector.load %arg3[%c0_10, %c0_11] : memref<64x1xf32, #tpu.memory_space<vmem>>, vector<64x1xf32>
    %25 = vector.broadcast %24 : vector<64x1xf32> to vector<64x32xf32>
    %26 = arith.addf %23, %25 : vector<64x32xf32>
    %cst_12 = arith.constant 0.000000e+00 : f32
    %27 = vector.broadcast %cst_12 : f32 to vector<64x32xf32>
    %28 = arith.cmpf ogt, %26, %27 : vector<64x32xf32>
    %cst_13 = arith.constant 2.000000e-01 : f32
    %29 = vector.broadcast %cst_13 : f32 to vector<64x32xf32>
    %30 = arith.mulf %29, %26 : vector<64x32xf32>
    %31 = arith.select %28, %26, %30 : vector<64x32xi1>, vector<64x32xf32>
    %c0_14 = arith.constant 0 : index
    %c0_15 = arith.constant 0 : index
    %32 = vector.load %arg4[%c0_14, %c0_15] : memref<64x32xf32, #tpu.memory_space<vmem>>, vector<64x32xf32>
    %33 = arith.mulf %31, %32 : vector<64x32xf32>
    %cst_16 = arith.constant dense<0.000000e+00> : vector<32xf32>
    %34 = vector.multi_reduction <add>, %33, %cst_16 [0] : vector<64x32xf32> to vector<32xf32>
    %35 = vector.shape_cast %34 : vector<32xf32> to vector<1x32xf32>
    %c0_17 = arith.constant 0 : index
    %c0_18 = arith.constant 0 : index
    %36 = vector.load %arg6[%c0_17, %c0_18] : memref<32x2xf32, #tpu.memory_space<vmem>>, vector<32x2xf32>
    %cst_19 = arith.constant dense<0.000000e+00> : vector<1x2xf32>
    %37 = tpu.matmul %35, %36, %cst_19 {dimension_numbers = #tpu.dot_dimension_numbers<[1], [0], [0], [1], [0, 0, 1, 1], [], []>} : vector<1x32xf32>, vector<32x2xf32>, vector<1x2xf32> -> vector<1x2xf32>
    %c0_20 = arith.constant 0 : index
    %c0_21 = arith.constant 0 : index
    %38 = vector.load %arg5[%c0_20, %c0_21] : memref<1x1xf32, #tpu.memory_space<vmem>>, vector<1x1xf32>
    %39 = vector.broadcast %38 : vector<1x1xf32> to vector<1x2xf32>
    %40 = arith.addf %37, %39 : vector<1x2xf32>
    %cst_22 = arith.constant 0.000000e+00 : f32
    %41 = vector.broadcast %cst_22 : f32 to vector<1x2xf32>
    %42 = arith.subf %41, %40 : vector<1x2xf32>
    %43 = math.exp %42 : vector<1x2xf32>
    %cst_23 = arith.constant 1.000000e+00 : f32
    %44 = vector.broadcast %cst_23 : f32 to vector<1x2xf32>
    %45 = arith.addf %44, %43 : vector<1x2xf32>
    %46 = tpu.reciprocal %45 {approx = true} : vector<1x2xf32> -> vector<1x2xf32>
    %c0_24 = arith.constant 0 : index
    %c0_25 = arith.constant 0 : index
    %47 = vector.load %arg7[%c0_24, %c0_25] : memref<1x2xf32, #tpu.memory_space<vmem>>, vector<1x2xf32>
    tpu.vector_store %arg7[%c0_24, %c0_25], %46 {strides = array<i32>} : memref<1x2xf32, #tpu.memory_space<vmem>>, vector<1x2xf32>,
    return
  }
}

</mosaic_0001>

<llo_original>
// kernel: discriminator_forward.3
$region0: #{discriminator_forward.3}
  #allocation0 [shape = 'u32[]', space=smem, size = 0x4, offset = 0x4, fixed_abs, tag = 'smem constant byte address 0x4 - core index']
  #allocation1 [shape = 'u32[144,128]{1,0:T(1,128)}', space=vmem, size = 0x12000, scoped, tag = 'internal scratch']
  %s0 = inlined_call_operand.vmem [shape: bf16[16,16], index: 0, kind: input, shape index: {}]
  %s1 = inlined_call_operand.vmem [shape: bf16[16,512], index: 1, kind: input, shape index: {}]
  %s2 = inlined_call_operand.vmem [shape: f32[16,1], index: 2, kind: input, shape index: {}]
  %s3 = inlined_call_operand.vmem [shape: bf16[16,512], index: 3, kind: output, shape index: {}]
  %s4 = sld [smem:[#allocation0]]
  $region22: #{discriminator_forward.3} parent=0
    _
  %s6 = ssub.s32 1, %s4
  %s7 = scalar_select 0, %s6, %s4
  // Predicated region
  $region2: #{discriminator_forward.3} parent=0 // pred_check
    _
  $region3: #{discriminator_forward.3} parent=0 // pred_check_branch
    %9 = sbr.rel (0) target = $region5
  $region4: #{discriminator_forward.3} parent=0 // pred_region
    _
  $region5: #{discriminator_forward.3} parent=0 // pred_fallthru
    _
  // Predicated region
  $region6: #{discriminator_forward.3} parent=0 // pred_check
    _
  $region7: #{discriminator_forward.3} parent=0 // pred_check_branch
    %11 = sbr.rel (0) target = $region9
  $region8: #{discriminator_forward.3} parent=0 // pred_region
    _
  $region9: #{discriminator_forward.3} parent=0 // pred_fallthru
    _
  // Predicated region
  $region10: #{discriminator_forward.3} parent=0 // pred_check
    _
  $region11: #{discriminator_forward.3} parent=0 // pred_check_branch
    %13 = sbr.rel (0) target = $region13
  $region12: #{discriminator_forward.3} parent=0 // pred_region
    _
  $region13: #{discriminator_forward.3} parent=0 // pred_fallthru
    _
  %v15 = vld [vmem:[%s0] sm:$0xf]
  %v16 = vld [vmem:[%s0 + $0x4] sm:$0xf]
  %v17 = vld [vmem:[%s1] sm:$0xff]
  %v18 = vld [vmem:[%s1 + $0x8] sm:$0xff]
  %v19 = vld [vmem:[%s1 + $0x10] sm:$0xff]
  %v20 = vld [vmem:[%s1 + $0x18] sm:$0xff]
  %v21 = vld [vmem:[%s2] sm:$0xff]
  %v22 = vld [vmem:[%s2 + $0x8] sm:$0xff]
  %24 = vset.pattern.permute.xlu0 0
  %25 = vperm.xlu0 %24, %v21
  %v26 = vpop.permute.xlu0 %25
  %29 = vset.pattern.permute.xlu0 0
  %30 = vperm.xlu0 %29, %v22
  %v31 = vpop.permute.xlu0 %30
  %v35 = vunpack.c.l.b16 %v15
  %v36 = vunpack.c.l.b16 %v16
  %v37 = vpack.c.b16 %v36, %v35
  %v42 = vunpack.c.l.b16 %v17
  %v43 = vunpack.c.h.b16 %v17
  %v44 = vunpack.c.l.b16 %v18
  %v45 = vunpack.c.h.b16 %v18
  %v46 = vunpack.c.l.b16 %v19
  %v47 = vunpack.c.h.b16 %v19
  %v48 = vunpack.c.l.b16 %v20
  %v49 = vunpack.c.h.b16 %v20
  %v50 = vpack.c.b16 %v46, %v42
  %v51 = vpack.c.b16 %v47, %v43
  %v52 = vpack.c.b16 %v48, %v44
  %v53 = vpack.c.b16 %v49, %v45
  %vm58 = vcmask 130048
  %v60 = vsel %vm58, %v37, 0
  %62 = vmatprep.subr.bf16.mxu0 %v51
  %63 = vmatpush1.bf16.msra.mxu0 %v50
  %64 = vmatprep.subr.bf16.mxu0 0
  %65 = vmatpush1.bf16.msra.mxu0 0
  %66 = vmatprep.subr.bf16.mxu0 0
  %67 = vmatpush1.bf16.msra.mxu0 0
  %68 = vmatprep.subr.bf16.mxu0 0
  %69 = vmatpush1.bf16.msra.mxu0 0
  %70 = vmatprep.subr.bf16.mxu0 0
  %71 = vmatpush1.bf16.msra.mxu0 0
  %72 = vmatprep.subr.bf16.mxu0 0
  %73 = vmatpush1.bf16.msra.mxu0 0
  %74 = vmatprep.subr.bf16.mxu0 0
  %75 = vmatpush1.bf16.msra.mxu0 0
  %76 = vmatprep.subr.bf16.mxu0 0
  %77 = vmatpush1.bf16.msra.mxu0 0
  %78 = vmatprep.subr.bf16.mxu0 0
  %79 = vmatpush1.bf16.msra.mxu0 0
  %80 = vmatprep.subr.bf16.mxu0 0
  %81 = vmatpush1.bf16.msra.mxu0 0
  %82 = vmatprep.subr.bf16.mxu0 0
  %83 = vmatpush1.bf16.msra.mxu0 0
  %84 = vmatprep.subr.bf16.mxu0 0
  %85 = vmatpush1.bf16.msra.mxu0 0
  %86 = vmatprep.subr.bf16.mxu0 0
  %87 = vmatpush1.bf16.msra.mxu0 0
  %88 = vmatprep.subr.bf16.mxu0 0
  %89 = vmatpush1.bf16.msra.mxu0 0
  %90 = vmatprep.subr.bf16.mxu0 0
  %91 = vmatpush1.bf16.msra.mxu0 0
  %92 = vmatprep.subr.bf16.mxu0 0
  %93 = vmatpush1.bf16.msra.mxu0 0
  %94 = vmatprep.mubr.bf16.mxu0 0
  %95 = vmatmul.mubr.bf16.gmra.mrb[0].mxu0 %v60
  %v96 = vpop.f32.mrb[0].mxu0
  %v97 = vadd.f32 %v26, %v96
  %v98 = vpop.f32.mrb[0].mxu0
  %v99 = vadd.f32 %v26, %v98
  %v100 = vpop.f32.mrb[0].mxu0
  %v101 = vadd.f32 %v31, %v100
  %v102 = vpop.f32.mrb[0].mxu0
  %v103 = vadd.f32 %v31, %v102
  %104 = vdwg.mxu0
  %105 = vmatprep.subr.bf16.mxu0 %v53
  %106 = vmatpush1.bf16.msra.mxu0 %v52
  %107 = vmatprep.subr.bf16.mxu0 0
  %108 = vmatpush1.bf16.msra.mxu0 0
  %109 = vmatprep.subr.bf16.mxu0 0
  %110 = vmatpush1.bf16.msra.mxu0 0
  %111 = vmatprep.subr.bf16.mxu0 0
  %112 = vmatpush1.bf16.msra.mxu0 0
  %113 = vmatprep.subr.bf16.mxu0 0
  %114 = vmatpush1.bf16.msra.mxu0 0
  %115 = vmatprep.subr.bf16.mxu0 0
  %116 = vmatpush1.bf16.msra.mxu0 0
  %117 = vmatprep.subr.bf16.mxu0 0
  %118 = vmatpush1.bf16.msra.mxu0 0
  %119 = vmatprep.subr.bf16.mxu0 0
  %120 = vmatpush1.bf16.msra.mxu0 0
  %121 = vmatprep.subr.bf16.mxu0 0
  %122 = vmatpush1.bf16.msra.mxu0 0
  %123 = vmatprep.subr.bf16.mxu0 0
  %124 = vmatpush1.bf16.msra.mxu0 0
  %125 = vmatprep.subr.bf16.mxu0 0
  %126 = vmatpush1.bf16.msra.mxu0 0
  %127 = vmatprep.subr.bf16.mxu0 0
  %128 = vmatpush1.bf16.msra.mxu0 0
  %129 = vmatprep.subr.bf16.mxu0 0
  %130 = vmatpush1.bf16.msra.mxu0 0
  %131 = vmatprep.subr.bf16.mxu0 0
  %132 = vmatpush1.bf16.msra.mxu0 0
  %133 = vmatprep.subr.bf16.mxu0 0
  %134 = vmatpush1.bf16.msra.mxu0 0
  %135 = vmatprep.subr.bf16.mxu0 0
  %136 = vmatpush1.bf16.msra.mxu0 0
  %137 = vmatprep.mubr.bf16.mxu0 0
  %138 = vmatmul.mubr.bf16.gmra.mrb[0].mxu0 %v60
  %v139 = vpop.f32.mrb[0].mxu0
  %v140 = vadd.f32 %v26, %v139
  %v141 = vpop.f32.mrb[0].mxu0
  %v142 = vadd.f32 %v26, %v141
  %v143 = vpop.f32.mrb[0].mxu0
  %v144 = vadd.f32 %v31, %v143
  %v145 = vpop.f32.mrb[0].mxu0
  %v146 = vadd.f32 %v31, %v145
  %147 = vdwg.mxu0
  %vm148 = vcmp.gt.f32.partialorder %v97, 0.0
  %vm149 = vcmp.gt.f32.partialorder %v99, 0.0
  %vm150 = vcmp.gt.f32.partialorder %v140, 0.0
  %vm151 = vcmp.gt.f32.partialorder %v142, 0.0
  %vm152 = vcmp.gt.f32.partialorder %v101, 0.0
  %vm153 = vcmp.gt.f32.partialorder %v103, 0.0
  %vm154 = vcmp.gt.f32.partialorder %v144, 0.0
  %vm155 = vcmp.gt.f32.partialorder %v146, 0.0
  %v156 = vmul.f32 %v97, 0.2
  %v157 = vmul.f32 %v99, 0.2
  %v158 = vmul.f32 %v140, 0.2
  %v159 = vmul.f32 %v142, 0.2
  %v160 = vmul.f32 %v101, 0.2
  %v161 = vmul.f32 %v103, 0.2
  %v162 = vmul.f32 %v144, 0.2
  %v163 = vmul.f32 %v146, 0.2
  %v164 = vsel %vm148, %v97, %v156
  %v165 = vsel %vm149, %v99, %v157
  %v166 = vsel %vm150, %v140, %v158
  %v167 = vsel %vm151, %v142, %v159
  %v168 = vsel %vm152, %v101, %v160
  %v169 = vsel %vm153, %v103, %v161
  %v170 = vsel %vm154, %v144, %v162
  %v171 = vsel %vm155, %v146, %v163
  %v172 = vpack.c.bf16 %v168, %v164
  %v173 = vpack.c.bf16 %v169, %v165
  %v174 = vpack.c.bf16 %v170, %v166
  %v175 = vpack.c.bf16 %v171, %v167
  %v180 = vunpack.c.l.b16 %v172
  %v181 = vunpack.c.l.b16 %v173
  %v182 = vunpack.c.l.b16 %v174
  %v183 = vunpack.c.l.b16 %v175
  %v184 = vunpack.c.h.b16 %v172
  %v185 = vunpack.c.h.b16 %v173
  %v186 = vunpack.c.h.b16 %v174
  %v187 = vunpack.c.h.b16 %v175
  %v188 = vpack.c.b16 %v181, %v180
  %v189 = vpack.c.b16 %v183, %v182
  %v190 = vpack.c.b16 %v185, %v184
  %v191 = vpack.c.b16 %v187, %v186
  %196 = vst [vmem:[%s3] sm:$0xff] %v188
  %197 = vst [vmem:[%s3 + $0x8] sm:$0xff] %v189
  %198 = vst [vmem:[%s3 + $0x10] sm:$0xff] %v190
  %199 = vst [vmem:[%s3 + $0x18] sm:$0xff] %v191
  // Predicated region
  $region14: #{discriminator_forward.3} parent=0 // pred_check
    _
  $region15: #{discriminator_forward.3} parent=0 // pred_check_branch
    %201 = sbr.rel (0) target = $region17
  $region16: #{discriminator_forward.3} parent=0 // pred_region
    _
  $region17: #{discriminator_forward.3} parent=0 // pred_fallthru
    _
  // Predicated region
  $region18: #{discriminator_forward.3} parent=0 // pred_check
    _
  $region19: #{discriminator_forward.3} parent=0 // pred_check_branch
    %203 = sbr.rel (0) target = $region21
  $region20: #{discriminator_forward.3} parent=0 // pred_region
    _
  $region21: #{discriminator_forward.3} parent=0 // pred_fallthru
    _

// kernel: discriminator_forward.4
$region0: #{discriminator_forward.4}
  #allocation0 [shape = 'u32[]', space=smem, size = 0x4, offset = 0x4, fixed_abs, tag = 'smem constant byte address 0x4 - core index']
  #allocation1 [shape = 'u32[144,128]{1,0:T(1,128)}', space=vmem, size = 0x12000, scoped, tag = 'internal scratch']
  %s0 = inlined_call_operand.vmem [shape: bf16[32,256], index: 0, kind: input, shape index: {}]
  %s1 = inlined_call_operand.vmem [shape: bf16[256,128], index: 1, kind: input, shape index: {}]
  %s2 = inlined_call_operand.vmem [shape: f32[32,1], index: 2, kind: input, shape index: {}]
  %s3 = inlined_call_operand.vmem [shape: f32[32,1], index: 3, kind: input, shape index: {}]
  %s4 = inlined_call_operand.vmem [shape: bf16[32,128], index: 4, kind: output, shape index: {}]
  %s5 = sld [smem:[#allocation0]]
  $region26: #{discriminator_forward.4} parent=0
    _
  %s7 = ssub.s32 1, %s5
  %s8 = scalar_select 0, %s7, %s5
  // Predicated region
  $region2: #{discriminator_forward.4} parent=0 // pred_check
    _
  $region3: #{discriminator_forward.4} parent=0 // pred_check_branch
    %10 = sbr.rel (0) target = $region5
  $region4: #{discriminator_forward.4} parent=0 // pred_region
    _
  $region5: #{discriminator_forward.4} parent=0 // pred_fallthru
    _
  // Predicated region
  $region6: #{discriminator_forward.4} parent=0 // pred_check
    _
  $region7: #{discriminator_forward.4} parent=0 // pred_check_branch
    %12 = sbr.rel (0) target = $region9
  $region8: #{discriminator_forward.4} parent=0 // pred_region
    _
  $region9: #{discriminator_forward.4} parent=0 // pred_fallthru
    _
  // Predicated region
  $region10: #{discriminator_forward.4} parent=0 // pred_check
    _
  $region11: #{discriminator_forward.4} parent=0 // pred_check_branch
    %14 = sbr.rel (0) target = $region13
  $region12: #{discriminator_forward.4} parent=0 // pred_region
    _
  $region13: #{discriminator_forward.4} parent=0 // pred_fallthru
    _
  // Predicated region
  $region14: #{discriminator_forward.4} parent=0 // pred_check
    _
  $region15: #{discriminator_forward.4} parent=0 // pred_check_branch
    %16 = sbr.rel (0) target = $region17
  $region16: #{discriminator_forward.4} parent=0 // pred_region
    _
  $region17: #{discriminator_forward.4} parent=0 // pred_fallthru
    _
  %v18 = vld [vmem:[%s0] sm:$0xff]
  %v19 = vld [vmem:[%s0 + $0x8] sm:$0xff]
  %v20 = vld [vmem:[%s0 + $0x10] sm:$0xff]
  %v21 = vld [vmem:[%s0 + $0x18] sm:$0xff]
  %v22 = vld [vmem:[%s1] sm:$0xf]
  %v23 = vld [vmem:[%s1 + $0x4] sm:$0xf]
  %v24 = vld [vmem:[%s1 + $0x8] sm:$0xf]
  %v25 = vld [vmem:[%s1 + $0xc] sm:$0xf]
  %v26 = vld [vmem:[%s1 + $0x10] sm:$0xf]
  %v27 = vld [vmem:[%s1 + $0x14] sm:$0xf]
  %v28 = vld [vmem:[%s1 + $0x18] sm:$0xf]
  %v29 = vld [vmem:[%s1 + $0x1c] sm:$0xf]
  %v30 = vld [vmem:[%s1 + $0x20] sm:$0xf]
  %v31 = vld [vmem:[%s1 + $0x24] sm:$0xf]
  %v32 = vld [vmem:[%s1 + $0x28] sm:$0xf]
  %v33 = vld [vmem:[%s1 + $0x2c] sm:$0xf]
  %v34 = vld [vmem:[%s1 + $0x30] sm:$0xf]
  %v35 = vld [vmem:[%s1 + $0x34] sm:$0xf]
  %v36 = vld [vmem:[%s1 + $0x38] sm:$0xf]
  %v37 = vld [vmem:[%s1 + $0x3c] sm:$0xf]
  %v38 = vld [vmem:[%s1 + $0x40] sm:$0xf]
  %v39 = vld [vmem:[%s1 + $0x44] sm:$0xf]
  %v40 = vld [vmem:[%s1 + $0x48] sm:$0xf]
  %v41 = vld [vmem:[%s1 + $0x4c] sm:$0xf]
  %v42 = vld [vmem:[%s1 + $0x50] sm:$0xf]
  %v43 = vld [vmem:[%s1 + $0x54] sm:$0xf]
  %v44 = vld [vmem:[%s1 + $0x58] sm:$0xf]
  %v45 = vld [vmem:[%s1 + $0x5c] sm:$0xf]
  %v46 = vld [vmem:[%s1 + $0x60] sm:$0xf]
  %v47 = vld [vmem:[%s1 + $0x64] sm:$0xf]
  %v48 = vld [vmem:[%s1 + $0x68] sm:$0xf]
  %v49 = vld [vmem:[%s1 + $0x6c] sm:$0xf]
  %v50 = vld [vmem:[%s1 + $0x70] sm:$0xf]
  %v51 = vld [vmem:[%s1 + $0x74] sm:$0xf]
  %v52 = vld [vmem:[%s1 + $0x78] sm:$0xf]
  %v53 = vld [vmem:[%s1 + $0x7c] sm:$0xf]
  %v58 = vunpack.c.l.b16 %v18
  %v59 = vunpack.c.h.b16 %v18
  %v60 = vunpack.c.l.b16 %v19
  %v61 = vunpack.c.h.b16 %v19
  %v62 = vunpack.c.l.b16 %v20
  %v63 = vunpack.c.h.b16 %v20
  %v64 = vunpack.c.l.b16 %v21
  %v65 = vunpack.c.h.b16 %v21
  %v66 = vpack.c.b16 %v60, %v58
  %v67 = vpack.c.b16 %v61, %v59
  %v68 = vpack.c.b16 %v64, %v62
  %v69 = vpack.c.b16 %v65, %v63
  %v106 = vunpack.c.l.b16 %v22
  %v107 = vunpack.c.l.b16 %v23
  %v108 = vunpack.c.l.b16 %v24
  %v109 = vunpack.c.l.b16 %v25
  %v110 = vunpack.c.l.b16 %v26
  %v111 = vunpack.c.l.b16 %v27
  %v112 = vunpack.c.l.b16 %v28
  %v113 = vunpack.c.l.b16 %v29
  %v114 = vunpack.c.l.b16 %v30
  %v115 = vunpack.c.l.b16 %v31
  %v116 = vunpack.c.l.b16 %v32
  %v117 = vunpack.c.l.b16 %v33
  %v118 = vunpack.c.l.b16 %v34
  %v119 = vunpack.c.l.b16 %v35
  %v120 = vunpack.c.l.b16 %v36
  %v121 = vunpack.c.l.b16 %v37
  %v122 = vunpack.c.l.b16 %v38
  %v123 = vunpack.c.l.b16 %v39
  %v124 = vunpack.c.l.b16 %v40
  %v125 = vunpack.c.l.b16 %v41
  %v126 = vunpack.c.l.b16 %v42
  %v127 = vunpack.c.l.b16 %v43
  %v128 = vunpack.c.l.b16 %v44
  %v129 = vunpack.c.l.b16 %v45
  %v130 = vunpack.c.l.b16 %v46
  %v131 = vunpack.c.l.b16 %v47
  %v132 = vunpack.c.l.b16 %v48
  %v133 = vunpack.c.l.b16 %v49
  %v134 = vunpack.c.l.b16 %v50
  %v135 = vunpack.c.l.b16 %v51
  %v136 = vunpack.c.l.b16 %v52
  %v137 = vunpack.c.l.b16 %v53
  %v138 = vpack.c.b16 %v107, %v106
  %v139 = vpack.c.b16 %v109, %v108
  %v140 = vpack.c.b16 %v111, %v110
  %v141 = vpack.c.b16 %v113, %v112
  %v142 = vpack.c.b16 %v115, %v114
  %v143 = vpack.c.b16 %v117, %v116
  %v144 = vpack.c.b16 %v119, %v118
  %v145 = vpack.c.b16 %v121, %v120
  %v146 = vpack.c.b16 %v123, %v122
  %v147 = vpack.c.b16 %v125, %v124
  %v148 = vpack.c.b16 %v127, %v126
  %v149 = vpack.c.b16 %v129, %v128
  %v150 = vpack.c.b16 %v131, %v130
  %v151 = vpack.c.b16 %v133, %v132
  %v152 = vpack.c.b16 %v135, %v134
  %v153 = vpack.c.b16 %v137, %v136
  %170 = vmatprep.subr.bf16.mxu0 0
  %171 = vmatpush1.bf16.msra.mxu0 %v138
  %172 = vmatprep.subr.bf16.mxu0 0
  %173 = vmatpush1.bf16.msra.mxu0 %v139
  %174 = vmatprep.subr.bf16.mxu0 0
  %175 = vmatpush1.bf16.msra.mxu0 %v140
  %176 = vmatprep.subr.bf16.mxu0 0
  %177 = vmatpush1.bf16.msra.mxu0 %v141
  %178 = vmatprep.subr.bf16.mxu0 0
  %179 = vmatpush1.bf16.msra.mxu0 %v142
  %180 = vmatprep.subr.bf16.mxu0 0
  %181 = vmatpush1.bf16.msra.mxu0 %v143
  %182 = vmatprep.subr.bf16.mxu0 0
  %183 = vmatpush1.bf16.msra.mxu0 %v144
  %184 = vmatprep.subr.bf16.mxu0 0
  %185 = vmatpush1.bf16.msra.mxu0 %v145
  %186 = vmatprep.subr.bf16.mxu0 0
  %187 = vmatpush1.bf16.msra.mxu0 %v146
  %188 = vmatprep.subr.bf16.mxu0 0
  %189 = vmatpush1.bf16.msra.mxu0 %v147
  %190 = vmatprep.subr.bf16.mxu0 0
  %191 = vmatpush1.bf16.msra.mxu0 %v148
  %192 = vmatprep.subr.bf16.mxu0 0
  %193 = vmatpush1.bf16.msra.mxu0 %v149
  %194 = vmatprep.subr.bf16.mxu0 0
  %195 = vmatpush1.bf16.msra.mxu0 %v150
  %196 = vmatprep.subr.bf16.mxu0 0
  %197 = vmatpush1.bf16.msra.mxu0 %v151
  %198 = vmatprep.subr.bf16.mxu0 0
  %199 = vmatpush1.bf16.msra.mxu0 %v152
  %200 = vmatprep.subr.bf16.mxu0 0
  %201 = vmatpush1.bf16.msra.mxu0 %v153
  %202 = vmatprep.mubr.bf16.mxu0 %v67
  %203 = vmatmul.mubr.bf16.gmra.mrb[0].mxu0 %v66
  %v204 = vpop.f32.mrb[0].mxu0
  %v205 = vadd.f32 0.0, %v204
  %v206 = vpop.f32.mrb[0].mxu0
  %v207 = vpop.f32.mrb[0].mxu0
  %v208 = vadd.f32 0.0, %v207
  %v209 = vpop.f32.mrb[0].mxu0
  %210 = vmatprep.mubr.bf16.mxu0 %v69
  %211 = vmatmul.mubr.bf16.gmra.mrb[0].mxu0 %v68
  %v212 = vpop.f32.mrb[0].mxu0
  %v213 = vadd.f32 0.0, %v212
  %v214 = vpop.f32.mrb[0].mxu0
  %v215 = vpop.f32.mrb[0].mxu0
  %v216 = vadd.f32 0.0, %v215
  %v217 = vpop.f32.mrb[0].mxu0
  %218 = vdwg.mxu0
  %219 = vadd.xlane.f32.xlu0 %v205
  %v220 = vpop.xlane.xlu0 %219
  %221 = vadd.xlane.f32.xlu0 %v208
  %v222 = vpop.xlane.xlu0 %221
  %223 = vadd.xlane.f32.xlu0 %v213
  %v224 = vpop.xlane.xlu0 %223
  %225 = vadd.xlane.f32.xlu0 %v216
  %v226 = vpop.xlane.xlu0 %225
  %v227 = vrcp.pop 128.0
  %v228 = vmul.f32 %v220, %v227
  %v229 = vmul.f32 %v222, %v227
  %v230 = vmul.f32 %v224, %v227
  %v231 = vmul.f32 %v226, %v227
  %v232 = vsub.f32 %v205, %v228
  %v233 = vsub.f32 %v208, %v229
  %v234 = vsub.f32 %v213, %v230
  %v235 = vsub.f32 %v216, %v231
  %v236 = vmul.f32 %v232, %v232
  %v237 = vmul.f32 %v233, %v233
  %v238 = vmul.f32 %v234, %v234
  %v239 = vmul.f32 %v235, %v235
  %240 = vadd.xlane.f32.xlu0 %v236
  %v241 = vpop.xlane.xlu0 %240
  %242 = vadd.xlane.f32.xlu0 %v237
  %v243 = vpop.xlane.xlu0 %242
  %244 = vadd.xlane.f32.xlu0 %v238
  %v245 = vpop.xlane.xlu0 %244
  %246 = vadd.xlane.f32.xlu0 %v239
  %v247 = vpop.xlane.xlu0 %246
  %v248 = vmul.f32 %v241, %v227
  %v249 = vmul.f32 %v243, %v227
  %v250 = vmul.f32 %v245, %v227
  %v251 = vmul.f32 %v247, %v227
  %v252 = vadd.f32 %v248, 1e-05
  %v253 = vadd.f32 %v249, 1e-05
  %v254 = vadd.f32 %v250, 1e-05
  %v255 = vadd.f32 %v251, 1e-05
  %v256 = vrsqrt.pop %v252
  %v257 = vrsqrt.pop %v253
  %v258 = vrsqrt.pop %v254
  %v259 = vrsqrt.pop %v255
  %v260 = vmul.f32 %v232, %v256
  %v261 = vmul.f32 %v233, %v257
  %v262 = vmul.f32 %v234, %v258
  %v263 = vmul.f32 %v235, %v259
  %v264 = vld [vmem:[%s2] sm:$0xff]
  %v265 = vld [vmem:[%s2 + $0x8] sm:$0xff]
  %v266 = vld [vmem:[%s2 + $0x10] sm:$0xff]
  %v267 = vld [vmem:[%s2 + $0x18] sm:$0xff]
  %269 = vset.pattern.permute.xlu0 0
  %270 = vperm.xlu0 %269, %v264
  %v271 = vpop.permute.xlu0 %270
  %274 = vset.pattern.permute.xlu0 0
  %275 = vperm.xlu0 %274, %v265
  %v276 = vpop.permute.xlu0 %275
  %279 = vset.pattern.permute.xlu0 0
  %280 = vperm.xlu0 %279, %v266
  %v281 = vpop.permute.xlu0 %280
  %284 = vset.pattern.permute.xlu0 0
  %285 = vperm.xlu0 %284, %v267
  %v286 = vpop.permute.xlu0 %285
  %v288 = vmul.f32 %v260, %v271
  %v289 = vmul.f32 %v261, %v276
  %v290 = vmul.f32 %v262, %v281
  %v291 = vmul.f32 %v263, %v286
  %v292 = vld [vmem:[%s3] sm:$0xff]
  %v293 = vld [vmem:[%s3 + $0x8] sm:$0xff]
  %v294 = vld [vmem:[%s3 + $0x10] sm:$0xff]
  %v295 = vld [vmem:[%s3 + $0x18] sm:$0xff]
  %297 = vset.pattern.permute.xlu0 0
  %298 = vperm.xlu0 %297, %v292
  %v299 = vpop.permute.xlu0 %298
  %302 = vset.pattern.permute.xlu0 0
  %303 = vperm.xlu0 %302, %v293
  %v304 = vpop.permute.xlu0 %303
  %307 = vset.pattern.permute.xlu0 0
  %308 = vperm.xlu0 %307, %v294
  %v309 = vpop.permute.xlu0 %308
  %312 = vset.pattern.permute.xlu0 0
  %313 = vperm.xlu0 %312, %v295
  %v314 = vpop.permute.xlu0 %313
  %v316 = vadd.f32 %v288, %v299
  %v317 = vadd.f32 %v289, %v304
  %v318 = vadd.f32 %v290, %v309
  %v319 = vadd.f32 %v291, %v314
  %vm320 = vcmp.gt.f32.partialorder %v316, 0.0
  %vm321 = vcmp.gt.f32.partialorder %v317, 0.0
  %vm322 = vcmp.gt.f32.partialorder %v318, 0.0
  %vm323 = vcmp.gt.f32.partialorder %v319, 0.0
  %v324 = vmul.f32 %v316, 0.2
  %v325 = vmul.f32 %v317, 0.2
  %v326 = vmul.f32 %v318, 0.2
  %v327 = vmul.f32 %v319, 0.2
  %v328 = vsel %vm320, %v316, %v324
  %v329 = vsel %vm321, %v317, %v325
  %v330 = vsel %vm322, %v318, %v326
  %v331 = vsel %vm323, %v319, %v327
  %v332 = vpack.c.bf16 %v329, %v328
  %v333 = vpack.c.bf16 %v331, %v330
  %v336 = vunpack.c.l.b16 %v332
  %v337 = vunpack.c.h.b16 %v332
  %v338 = vunpack.c.l.b16 %v333
  %v339 = vunpack.c.h.b16 %v333
  %v340 = vpack.c.b16 %v336, %v336
  %v341 = vpack.c.b16 %v337, %v337
  %v342 = vpack.c.b16 %v338, %v338
  %v343 = vpack.c.b16 %v339, %v339
  %348 = vst [vmem:[%s4] sm:$0xf] %v340
  %349 = vst [vmem:[%s4 + $0x4] sm:$0xf] %v341
  %350 = vst [vmem:[%s4 + $0x8] sm:$0xf] %v342
  %351 = vst [vmem:[%s4 + $0xc] sm:$0xf] %v343
  // Predicated region
  $region18: #{discriminator_forward.4} parent=0 // pred_check
    _
  $region19: #{discriminator_forward.4} parent=0 // pred_check_branch
    %353 = sbr.rel (0) target = $region21
  $region20: #{discriminator_forward.4} parent=0 // pred_region
    _
  $region21: #{discriminator_forward.4} parent=0 // pred_fallthru
    _
  // Predicated region
  $region22: #{discriminator_forward.4} parent=0 // pred_check
    _
  $region23: #{discriminator_forward.4} parent=0 // pred_check_branch
    %355 = sbr.rel (0) target = $region25
  $region24: #{discriminator_forward.4} parent=0 // pred_region
    _
  $region25: #{discriminator_forward.4} parent=0 // pred_fallthru
    _

// kernel: discriminator_forward.5
$region0: #{discriminator_forward.5}
  #allocation0 [shape = 'u32[]', space=smem, size = 0x4, offset = 0x4, fixed_abs, tag = 'smem constant byte address 0x4 - core index']
  #allocation1 [shape = 'u32[144,128]{1,0:T(1,128)}', space=vmem, size = 0x12000, scoped, tag = 'internal scratch']
  #allocation2 [shape = 'f32[1,1]{1,0:T(1,128)S(1)}', space=vmem, size = 0x200, scoped, tag = 'scoped memory for discriminator_forward.5']
  %s0 = inlined_call_operand.vmem [shape: bf16[64,512], index: 0, kind: input, shape index: {}]
  %s1 = inlined_call_operand.vmem [shape: bf16[512,32], index: 1, kind: input, shape index: {}]
  %s2 = inlined_call_operand.vmem [shape: f32[64,1], index: 2, kind: input, shape index: {}]
  %s3 = inlined_call_operand.vmem [shape: f32[64,1], index: 3, kind: input, shape index: {}]
  %s4 = inlined_call_operand.vmem [shape: f32[64,32], index: 4, kind: input, shape index: {}]
  %s5 = inlined_call_operand.<no memory space> [shape: f32[1,1], index: 5, kind: input, shape index: {}]
  %s6 = inlined_call_operand.vmem [shape: f32[32,2], index: 6, kind: input, shape index: {}]
  %s7 = inlined_call_operand.hbm [shape: f32[1,2], index: 7, kind: output, shape index: {}]
  %s8 = sld [smem:[#allocation0]]
  $region38: #{discriminator_forward.5} parent=0
    _
  %s10 = ssub.s32 1, %s8
  %s11 = scalar_select 0, %s10, %s8
  %v12 = vstv %s5
  %13 = vst [vmem:[#allocation2] sm:$0x1] %v12
  $region1: #{discriminator_forward.5} parent=0
    #allocation3 [shape = 'u8[512]{0}', space=vmem, size = 0x400, scoped, tag = 'output window, operand 0, single buffered']
    #allocation4 [shape = 's32[1]{0}', space=sflag, size = 0x4, scoped, tag = 'scoped memory for discriminator_forward.5']
    %14 = vsyncpa [#allocation4], 0
    // Predicated region
    $region2: #{discriminator_forward.5} parent=1 // pred_check
      _
    $region3: #{discriminator_forward.5} parent=1 // pred_check_branch
      %16 = sbr.rel (0) target = $region5
    $region4: #{discriminator_forward.5} parent=1 // pred_region
      _
    $region5: #{discriminator_forward.5} parent=1 // pred_fallthru
      _
    // Predicated region
    $region6: #{discriminator_forward.5} parent=1 // pred_check
      _
    $region7: #{discriminator_forward.5} parent=1 // pred_check_branch
      %18 = sbr.rel (0) target = $region9
    $region8: #{discriminator_forward.5} parent=1 // pred_region
      _
    $region9: #{discriminator_forward.5} parent=1 // pred_fallthru
      _
    // Predicated region
    $region10: #{discriminator_forward.5} parent=1 // pred_check
      _
    $region11: #{discriminator_forward.5} parent=1 // pred_check_branch
      %20 = sbr.rel (0) target = $region13
    $region12: #{discriminator_forward.5} parent=1 // pred_region
      _
    $region13: #{discriminator_forward.5} parent=1 // pred_fallthru
      _
    // Predicated region
    $region14: #{discriminator_forward.5} parent=1 // pred_check
      _
    $region15: #{discriminator_forward.5} parent=1 // pred_check_branch
      %22 = sbr.rel (0) target = $region17
    $region16: #{discriminator_forward.5} parent=1 // pred_region
      _
    $region17: #{discriminator_forward.5} parent=1 // pred_fallthru
      _
    // Predicated region
    $region18: #{discriminator_forward.5} parent=1 // pred_check
      _
    $region19: #{discriminator_forward.5} parent=1 // pred_check_branch
      %24 = sbr.rel (0) target = $region21
    $region20: #{discriminator_forward.5} parent=1 // pred_region
      _
    $region21: #{discriminator_forward.5} parent=1 // pred_fallthru
      _
    // Predicated region
    $region22: #{discriminator_forward.5} parent=1 // pred_check
      _
    $region23: #{discriminator_forward.5} parent=1 // pred_check_branch
      %26 = sbr.rel (0) target = $region25
    $region24: #{discriminator_forward.5} parent=1 // pred_region
      _
    $region25: #{discriminator_forward.5} parent=1 // pred_fallthru
      _
    // Predicated region
    $region26: #{discriminator_forward.5} parent=1 // pred_check
      _
    $region27: #{discriminator_forward.5} parent=1 // pred_check_branch
      %28 = sbr.rel (0) target = $region29
    $region28: #{discriminator_forward.5} parent=1 // pred_region
      _
    $region29: #{discriminator_forward.5} parent=1 // pred_fallthru
      _
    %v30 = vld [vmem:[%s0] sm:$0xff]
    %v31 = vld [vmem:[%s0 + $0x8] sm:$0xff]
    %v32 = vld [vmem:[%s0 + $0x10] sm:$0xff]
    %v33 = vld [vmem:[%s0 + $0x18] sm:$0xff]
    %v34 = vld [vmem:[%s0 + $0x20] sm:$0xff]
    %v35 = vld [vmem:[%s0 + $0x28] sm:$0xff]
    %v36 = vld [vmem:[%s0 + $0x30] sm:$0xff]
    %v37 = vld [vmem:[%s0 + $0x38] sm:$0xff]
    %v38 = vld [vmem:[%s0 + $0x40] sm:$0xff]
    %v39 = vld [vmem:[%s0 + $0x48] sm:$0xff]
    %v40 = vld [vmem:[%s0 + $0x50] sm:$0xff]
    %v41 = vld [vmem:[%s0 + $0x58] sm:$0xff]
    %v42 = vld [vmem:[%s0 + $0x60] sm:$0xff]
    %v43 = vld [vmem:[%s0 + $0x68] sm:$0xff]
    %v44 = vld [vmem:[%s0 + $0x70] sm:$0xff]
    %v45 = vld [vmem:[%s0 + $0x78] sm:$0xff]
    %v46 = vld [vmem:[%s1] sm:$0xf]
    %v47 = vld [vmem:[%s1 + $0x4] sm:$0xf]
    %v48 = vld [vmem:[%s1 + $0x8] sm:$0xf]
    %v49 = vld [vmem:[%s1 + $0xc] sm:$0xf]
    %v50 = vld [vmem:[%s1 + $0x10] sm:$0xf]
    %v51 = vld [vmem:[%s1 + $0x14] sm:$0xf]
    %v52 = vld [vmem:[%s1 + $0x18] sm:$0xf]
    %v53 = vld [vmem:[%s1 + $0x1c] sm:$0xf]
    %v54 = vld [vmem:[%s1 + $0x20] sm:$0xf]
    %v55 = vld [vmem:[%s1 + $0x24] sm:$0xf]
    %v56 = vld [vmem:[%s1 + $0x28] sm:$0xf]
    %v57 = vld [vmem:[%s1 + $0x2c] sm:$0xf]
    %v58 = vld [vmem:[%s1 + $0x30] sm:$0xf]
    %v59 = vld [vmem:[%s1 + $0x34] sm:$0xf]
    %v60 = vld [vmem:[%s1 + $0x38] sm:$0xf]
    %v61 = vld [vmem:[%s1 + $0x3c] sm:$0xf]
    %v62 = vld [vmem:[%s1 + $0x40] sm:$0xf]
    %v63 = vld [vmem:[%s1 + $0x44] sm:$0xf]
    %v64 = vld [vmem:[%s1 + $0x48] sm:$0xf]
    %v65 = vld [vmem:[%s1 + $0x4c] sm:$0xf]
    %v66 = vld [vmem:[%s1 + $0x50] sm:$0xf]
    %v67 = vld [vmem:[%s1 + $0x54] sm:$0xf]
    %v68 = vld [vmem:[%s1 + $0x58] sm:$0xf]
    %v69 = vld [vmem:[%s1 + $0x5c] sm:$0xf]
    %v70 = vld [vmem:[%s1 + $0x60] sm:$0xf]
    %v71 = vld [vmem:[%s1 + $0x64] sm:$0xf]
    %v72 = vld [vmem:[%s1 + $0x68] sm:$0xf]
    %v73 = vld [vmem:[%s1 + $0x6c] sm:$0xf]
    %v74 = vld [vmem:[%s1 + $0x70] sm:$0xf]
    %v75 = vld [vmem:[%s1 + $0x74] sm:$0xf]
    %v76 = vld [vmem:[%s1 + $0x78] sm:$0xf]
    %v77 = vld [vmem:[%s1 + $0x7c] sm:$0xf]
    %v78 = vld [vmem:[%s1 + $0x80] sm:$0xf]
    %v79 = vld [vmem:[%s1 + $0x84] sm:$0xf]
    %v80 = vld [vmem:[%s1 + $0x88] sm:$0xf]
    %v81 = vld [vmem:[%s1 + $0x8c] sm:$0xf]
    %v82 = vld [vmem:[%s1 + $0x90] sm:$0xf]
    %v83 = vld [vmem:[%s1 + $0x94] sm:$0xf]
    %v84 = vld [vmem:[%s1 + $0x98] sm:$0xf]
    %v85 = vld [vmem:[%s1 + $0x9c] sm:$0xf]
    %v86 = vld [vmem:[%s1 + $0xa0] sm:$0xf]
    %v87 = vld [vmem:[%s1 + $0xa4] sm:$0xf]
    %v88 = vld [vmem:[%s1 + $0xa8] sm:$0xf]
    %v89 = vld [vmem:[%s1 + $0xac] sm:$0xf]
    %v90 = vld [vmem:[%s1 + $0xb0] sm:$0xf]
    %v91 = vld [vmem:[%s1 + $0xb4] sm:$0xf]
    %v92 = vld [vmem:[%s1 + $0xb8] sm:$0xf]
    %v93 = vld [vmem:[%s1 + $0xbc] sm:$0xf]
    %v94 = vld [vmem:[%s1 + $0xc0] sm:$0xf]
    %v95 = vld [vmem:[%s1 + $0xc4] sm:$0xf]
    %v96 = vld [vmem:[%s1 + $0xc8] sm:$0xf]
    %v97 = vld [vmem:[%s1 + $0xcc] sm:$0xf]
    %v98 = vld [vmem:[%s1 + $0xd0] sm:$0xf]
    %v99 = vld [vmem:[%s1 + $0xd4] sm:$0xf]
    %v100 = vld [vmem:[%s1 + $0xd8] sm:$0xf]
    %v101 = vld [vmem:[%s1 + $0xdc] sm:$0xf]
    %v102 = vld [vmem:[%s1 + $0xe0] sm:$0xf]
    %v103 = vld [vmem:[%s1 + $0xe4] sm:$0xf]
    %v104 = vld [vmem:[%s1 + $0xe8] sm:$0xf]
    %v105 = vld [vmem:[%s1 + $0xec] sm:$0xf]
    %v106 = vld [vmem:[%s1 + $0xf0] sm:$0xf]
    %v107 = vld [vmem:[%s1 + $0xf4] sm:$0xf]
    %v108 = vld [vmem:[%s1 + $0xf8] sm:$0xf]
    %v109 = vld [vmem:[%s1 + $0xfc] sm:$0xf]
    %v126 = vunpack.c.l.b16 %v30
    %v127 = vunpack.c.h.b16 %v30
    %v128 = vunpack.c.l.b16 %v31
    %v129 = vunpack.c.h.b16 %v31
    %v130 = vunpack.c.l.b16 %v32
    %v131 = vunpack.c.h.b16 %v32
    %v132 = vunpack.c.l.b16 %v33
    %v133 = vunpack.c.h.b16 %v33
    %v134 = vunpack.c.l.b16 %v34
    %v135 = vunpack.c.h.b16 %v34
    %v136 = vunpack.c.l.b16 %v35
    %v137 = vunpack.c.h.b16 %v35
    %v138 = vunpack.c.l.b16 %v36
    %v139 = vunpack.c.h.b16 %v36
    %v140 = vunpack.c.l.b16 %v37
    %v141 = vunpack.c.h.b16 %v37
    %v142 = vunpack.c.l.b16 %v38
    %v143 = vunpack.c.h.b16 %v38
    %v144 = vunpack.c.l.b16 %v39
    %v145 = vunpack.c.h.b16 %v39
    %v146 = vunpack.c.l.b16 %v40
    %v147 = vunpack.c.h.b16 %v40
    %v148 = vunpack.c.l.b16 %v41
    %v149 = vunpack.c.h.b16 %v41
    %v150 = vunpack.c.l.b16 %v42
    %v151 = vunpack.c.h.b16 %v42
    %v152 = vunpack.c.l.b16 %v43
    %v153 = vunpack.c.h.b16 %v43
    %v154 = vunpack.c.l.b16 %v44
    %v155 = vunpack.c.h.b16 %v44
    %v156 = vunpack.c.l.b16 %v45
    %v157 = vunpack.c.h.b16 %v45
    %v158 = vpack.c.b16 %v130, %v126
    %v159 = vpack.c.b16 %v131, %v127
    %v160 = vpack.c.b16 %v132, %v128
    %v161 = vpack.c.b16 %v133, %v129
    %v162 = vpack.c.b16 %v138, %v134
    %v163 = vpack.c.b16 %v139, %v135
    %v164 = vpack.c.b16 %v140, %v136
    %v165 = vpack.c.b16 %v141, %v137
    %v166 = vpack.c.b16 %v146, %v142
    %v167 = vpack.c.b16 %v147, %v143
    %v168 = vpack.c.b16 %v148, %v144
    %v169 = vpack.c.b16 %v149, %v145
    %v170 = vpack.c.b16 %v154, %v150
    %v171 = vpack.c.b16 %v155, %v151
    %v172 = vpack.c.b16 %v156, %v152
    %v173 = vpack.c.b16 %v157, %v153
    %v254 = vunpack.c.l.b16 %v46
    %v255 = vunpack.c.l.b16 %v47
    %v256 = vunpack.c.l.b16 %v48
    %v257 = vunpack.c.l.b16 %v49
    %v258 = vunpack.c.l.b16 %v50
    %v259 = vunpack.c.l.b16 %v51
    %v260 = vunpack.c.l.b16 %v52
    %v261 = vunpack.c.l.b16 %v53
    %v262 = vunpack.c.l.b16 %v54
    %v263 = vunpack.c.l.b16 %v55
    %v264 = vunpack.c.l.b16 %v56
    %v265 = vunpack.c.l.b16 %v57
    %v266 = vunpack.c.l.b16 %v58
    %v267 = vunpack.c.l.b16 %v59
    %v268 = vunpack.c.l.b16 %v60
    %v269 = vunpack.c.l.b16 %v61
    %v270 = vunpack.c.l.b16 %v62
    %v271 = vunpack.c.l.b16 %v63
    %v272 = vunpack.c.l.b16 %v64
    %v273 = vunpack.c.l.b16 %v65
    %v274 = vunpack.c.l.b16 %v66
    %v275 = vunpack.c.l.b16 %v67
    %v276 = vunpack.c.l.b16 %v68
    %v277 = vunpack.c.l.b16 %v69
    %v278 = vunpack.c.l.b16 %v70
    %v279 = vunpack.c.l.b16 %v71
    %v280 = vunpack.c.l.b16 %v72
    %v281 = vunpack.c.l.b16 %v73
    %v282 = vunpack.c.l.b16 %v74
    %v283 = vunpack.c.l.b16 %v75
    %v284 = vunpack.c.l.b16 %v76
    %v285 = vunpack.c.l.b16 %v77
    %v286 = vunpack.c.l.b16 %v78
    %v287 = vunpack.c.l.b16 %v79
    %v288 = vunpack.c.l.b16 %v80
    %v289 = vunpack.c.l.b16 %v81
    %v290 = vunpack.c.l.b16 %v82
    %v291 = vunpack.c.l.b16 %v83
    %v292 = vunpack.c.l.b16 %v84
    %v293 = vunpack.c.l.b16 %v85
    %v294 = vunpack.c.l.b16 %v86
    %v295 = vunpack.c.l.b16 %v87
    %v296 = vunpack.c.l.b16 %v88
    %v297 = vunpack.c.l.b16 %v89
    %v298 = vunpack.c.l.b16 %v90
    %v299 = vunpack.c.l.b16 %v91
    %v300 = vunpack.c.l.b16 %v92
    %v301 = vunpack.c.l.b16 %v93
    %v302 = vunpack.c.l.b16 %v94
    %v303 = vunpack.c.l.b16 %v95
    %v304 = vunpack.c.l.b16 %v96
    %v305 = vunpack.c.l.b16 %v97
    %v306 = vunpack.c.l.b16 %v98
    %v307 = vunpack.c.l.b16 %v99
    %v308 = vunpack.c.l.b16 %v100
    %v309 = vunpack.c.l.b16 %v101
    %v310 = vunpack.c.l.b16 %v102
    %v311 = vunpack.c.l.b16 %v103
    %v312 = vunpack.c.l.b16 %v104
    %v313 = vunpack.c.l.b16 %v105
    %v314 = vunpack.c.l.b16 %v106
    %v315 = vunpack.c.l.b16 %v107
    %v316 = vunpack.c.l.b16 %v108
    %v317 = vunpack.c.l.b16 %v109
    %v318 = vpack.c.b16 %v255, %v254
    %v319 = vpack.c.b16 %v257, %v256
    %v320 = vpack.c.b16 %v259, %v258
    %v321 = vpack.c.b16 %v261, %v260
    %v322 = vpack.c.b16 %v263, %v262
    %v323 = vpack.c.b16 %v265, %v264
    %v324 = vpack.c.b16 %v267, %v266
    %v325 = vpack.c.b16 %v269, %v268
    %v326 = vpack.c.b16 %v271, %v270
    %v327 = vpack.c.b16 %v273, %v272
    %v328 = vpack.c.b16 %v275, %v274
    %v329 = vpack.c.b16 %v277, %v276
    %v330 = vpack.c.b16 %v279, %v278
    %v331 = vpack.c.b16 %v281, %v280
    %v332 = vpack.c.b16 %v283, %v282
    %v333 = vpack.c.b16 %v285, %v284
    %v334 = vpack.c.b16 %v287, %v286
    %v335 = vpack.c.b16 %v289, %v288
    %v336 = vpack.c.b16 %v291, %v290
    %v337 = vpack.c.b16 %v293, %v292
    %v338 = vpack.c.b16 %v295, %v294
    %v339 = vpack.c.b16 %v297, %v296
    %v340 = vpack.c.b16 %v299, %v298
    %v341 = vpack.c.b16 %v301, %v300
    %v342 = vpack.c.b16 %v303, %v302
    %v343 = vpack.c.b16 %v305, %v304
    %v344 = vpack.c.b16 %v307, %v306
    %v345 = vpack.c.b16 %v309, %v308
    %v346 = vpack.c.b16 %v311, %v310
    %v347 = vpack.c.b16 %v313, %v312
    %v348 = vpack.c.b16 %v315, %v314
    %v349 = vpack.c.b16 %v317, %v316
    %382 = vmatprep.subr.bf16.mxu0 0
    %383 = vmatpush1.bf16.msra.mxu0 %v318
    %384 = vmatprep.subr.bf16.mxu0 0
    %385 = vmatpush1.bf16.msra.mxu0 %v319
    %386 = vmatprep.subr.bf16.mxu0 0
    %387 = vmatpush1.bf16.msra.mxu0 %v320
    %388 = vmatprep.subr.bf16.mxu0 0
    %389 = vmatpush1.bf16.msra.mxu0 %v321
    %390 = vmatprep.subr.bf16.mxu0 0
    %391 = vmatpush1.bf16.msra.mxu0 %v322
    %392 = vmatprep.subr.bf16.mxu0 0
    %393 = vmatpush1.bf16.msra.mxu0 %v323
    %394 = vmatprep.subr.bf16.mxu0 0
    %395 = vmatpush1.bf16.msra.mxu0 %v324
    %396 = vmatprep.subr.bf16.mxu0 0
    %397 = vmatpush1.bf16.msra.mxu0 %v325
    %398 = vmatprep.subr.bf16.mxu0 0
    %399 = vmatpush1.bf16.msra.mxu0 %v326
    %400 = vmatprep.subr.bf16.mxu0 0
    %401 = vmatpush1.bf16.msra.mxu0 %v327
    %402 = vmatprep.subr.bf16.mxu0 0
    %403 = vmatpush1.bf16.msra.mxu0 %v328
    %404 = vmatprep.subr.bf16.mxu0 0
    %405 = vmatpush1.bf16.msra.mxu0 %v329
    %406 = vmatprep.subr.bf16.mxu0 0
    %407 = vmatpush1.bf16.msra.mxu0 %v330
    %408 = vmatprep.subr.bf16.mxu0 0
    %409 = vmatpush1.bf16.msra.mxu0 %v331
    %410 = vmatprep.subr.bf16.mxu0 0
    %411 = vmatpush1.bf16.msra.mxu0 %v332
    %412 = vmatprep.subr.bf16.mxu0 0
    %413 = vmatpush1.bf16.msra.mxu0 %v333
    %414 = vmatprep.mubr.bf16.mxu0 %v159
    %415 = vmatmul.mubr.bf16.gmra.mrb[0].mxu0 %v158
    %v416 = vpop.f32.mrb[0].mxu0
    %v417 = vadd.f32 0.0, %v416
    %v418 = vpop.f32.mrb[0].mxu0
    %v419 = vpop.f32.mrb[0].mxu0
    %v420 = vadd.f32 0.0, %v419
    %v421 = vpop.f32.mrb[0].mxu0
    %422 = vmatprep.mubr.bf16.mxu0 %v163
    %423 = vmatmul.mubr.bf16.gmra.mrb[0].mxu0 %v162
    %v424 = vpop.f32.mrb[0].mxu0
    %v425 = vadd.f32 0.0, %v424
    %v426 = vpop.f32.mrb[0].mxu0
    %v427 = vpop.f32.mrb[0].mxu0
    %v428 = vadd.f32 0.0, %v427
    %v429 = vpop.f32.mrb[0].mxu0
    %430 = vmatprep.mubr.bf16.mxu0 %v167
    %431 = vmatmul.mubr.bf16.gmra.mrb[0].mxu0 %v166
    %v432 = vpop.f32.mrb[0].mxu0
    %v433 = vadd.f32 0.0, %v432
    %v434 = vpop.f32.mrb[0].mxu0
    %v435 = vpop.f32.mrb[0].mxu0
    %v436 = vadd.f32 0.0, %v435
    %v437 = vpop.f32.mrb[0].mxu0
    %438 = vmatprep.mubr.bf16.mxu0 %v171
    %439 = vmatmul.mubr.bf16.gmra.mrb[0].mxu0 %v170
    %v440 = vpop.f32.mrb[0].mxu0
    %v441 = vadd.f32 0.0, %v440
    %v442 = vpop.f32.mrb[0].mxu0
    %v443 = vpop.f32.mrb[0].mxu0
    %v444 = vadd.f32 0.0, %v443
    %v445 = vpop.f32.mrb[0].mxu0
    %446 = vdwg.mxu0
    %447 = vmatprep.subr.bf16.mxu0 0
    %448 = vmatpush1.bf16.msra.mxu0 %v334
    %449 = vmatprep.subr.bf16.mxu0 0
    %450 = vmatpush1.bf16.msra.mxu0 %v335
    %451 = vmatprep.subr.bf16.mxu0 0
    %452 = vmatpush1.bf16.msra.mxu0 %v336
    %453 = vmatprep.subr.bf16.mxu0 0
    %454 = vmatpush1.bf16.msra.mxu0 %v337
    %455 = vmatprep.subr.bf16.mxu0 0
    %456 = vmatpush1.bf16.msra.mxu0 %v338
    %457 = vmatprep.subr.bf16.mxu0 0
    %458 = vmatpush1.bf16.msra.mxu0 %v339
    %459 = vmatprep.subr.bf16.mxu0 0
    %460 = vmatpush1.bf16.msra.mxu0 %v340
    %461 = vmatprep.subr.bf16.mxu0 0
    %462 = vmatpush1.bf16.msra.mxu0 %v341
    %463 = vmatprep.subr.bf16.mxu0 0
    %464 = vmatpush1.bf16.msra.mxu0 %v342
    %465 = vmatprep.subr.bf16.mxu0 0
    %466 = vmatpush1.bf16.msra.mxu0 %v343
    %467 = vmatprep.subr.bf16.mxu0 0
    %468 = vmatpush1.bf16.msra.mxu0 %v344
    %469 = vmatprep.subr.bf16.mxu0 0
    %470 = vmatpush1.bf16.msra.mxu0 %v345
    %471 = vmatprep.subr.bf16.mxu0 0
    %472 = vmatpush1.bf16.msra.mxu0 %v346
    %473 = vmatprep.subr.bf16.mxu0 0
    %474 = vmatpush1.bf16.msra.mxu0 %v347
    %475 = vmatprep.subr.bf16.mxu0 0
    %476 = vmatpush1.bf16.msra.mxu0 %v348
    %477 = vmatprep.subr.bf16.mxu0 0
    %478 = vmatpush1.bf16.msra.mxu0 %v349
    %479 = vmatprep.mubr.bf16.mxu0 %v161
    %480 = vmatmul.mubr.bf16.gmra.mrb[0].mxu0 %v160
    %v481 = vpop.f32.mrb[0].mxu0
    %v482 = vadd.f32 %v417, %v481
    %v483 = vpop.f32.mrb[0].mxu0
    %v484 = vpop.f32.mrb[0].mxu0
    %v485 = vadd.f32 %v420, %v484
    %v486 = vpop.f32.mrb[0].mxu0
    %487 = vmatprep.mubr.bf16.mxu0 %v165
    %488 = vmatmul.mubr.bf16.gmra.mrb[0].mxu0 %v164
    %v489 = vpop.f32.mrb[0].mxu0
    %v490 = vadd.f32 %v425, %v489
    %v491 = vpop.f32.mrb[0].mxu0
    %v492 = vpop.f32.mrb[0].mxu0
    %v493 = vadd.f32 %v428, %v492
    %v494 = vpop.f32.mrb[0].mxu0
    %495 = vmatprep.mubr.bf16.mxu0 %v169
    %496 = vmatmul.mubr.bf16.gmra.mrb[0].mxu0 %v168
    %v497 = vpop.f32.mrb[0].mxu0
    %v498 = vadd.f32 %v433, %v497
    %v499 = vpop.f32.mrb[0].mxu0
    %v500 = vpop.f32.mrb[0].mxu0
    %v501 = vadd.f32 %v436, %v500
    %v502 = vpop.f32.mrb[0].mxu0
    %503 = vmatprep.mubr.bf16.mxu0 %v173
    %504 = vmatmul.mubr.bf16.gmra.mrb[0].mxu0 %v172
    %v505 = vpop.f32.mrb[0].mxu0
    %v506 = vadd.f32 %v441, %v505
    %v507 = vpop.f32.mrb[0].mxu0
    %v508 = vpop.f32.mrb[0].mxu0
    %v509 = vadd.f32 %v444, %v508
    %v510 = vpop.f32.mrb[0].mxu0
    %511 = vdwg.mxu0
    %vm512 = vcmask 261120
    %v513 = vsel %vm512, %v482, 0.0
    %514 = vadd.xlane.f32.xlu0 %v513
    %v515 = vpop.xlane.xlu0 %514
    %v516 = vsel %vm512, %v485, 0.0
    %517 = vadd.xlane.f32.xlu0 %v516
    %v518 = vpop.xlane.xlu0 %517
    %v519 = vsel %vm512, %v490, 0.0
    %520 = vadd.xlane.f32.xlu0 %v519
    %v521 = vpop.xlane.xlu0 %520
    %v522 = vsel %vm512, %v493, 0.0
    %523 = vadd.xlane.f32.xlu0 %v522
    %v524 = vpop.xlane.xlu0 %523
    %v525 = vsel %vm512, %v498, 0.0
    %526 = vadd.xlane.f32.xlu0 %v525
    %v527 = vpop.xlane.xlu0 %526
    %v528 = vsel %vm512, %v501, 0.0
    %529 = vadd.xlane.f32.xlu0 %v528
    %v530 = vpop.xlane.xlu0 %529
    %v531 = vsel %vm512, %v506, 0.0
    %532 = vadd.xlane.f32.xlu0 %v531
    %v533 = vpop.xlane.xlu0 %532
    %v534 = vsel %vm512, %v509, 0.0
    %535 = vadd.xlane.f32.xlu0 %v534
    %v536 = vpop.xlane.xlu0 %535
    %v537 = vrcp.pop 32.0
    %v538 = vmul.f32 %v515, %v537
    %v539 = vmul.f32 %v518, %v537
    %v540 = vmul.f32 %v521, %v537
    %v541 = vmul.f32 %v524, %v537
    %v542 = vmul.f32 %v527, %v537
    %v543 = vmul.f32 %v530, %v537
    %v544 = vmul.f32 %v533, %v537
    %v545 = vmul.f32 %v536, %v537
    %v546 = vsub.f32 %v482, %v538
    %v547 = vsub.f32 %v485, %v539
    %v548 = vsub.f32 %v490, %v540
    %v549 = vsub.f32 %v493, %v541
    %v550 = vsub.f32 %v498, %v542
    %v551 = vsub.f32 %v501, %v543
    %v552 = vsub.f32 %v506, %v544
    %v553 = vsub.f32 %v509, %v545
    %v554 = vmul.f32 %v546, %v546
    %v555 = vmul.f32 %v547, %v547
    %v556 = vmul.f32 %v548, %v548
    %v557 = vmul.f32 %v549, %v549
    %v558 = vmul.f32 %v550, %v550
    %v559 = vmul.f32 %v551, %v551
    %v560 = vmul.f32 %v552, %v552
    %v561 = vmul.f32 %v553, %v553
    %v562 = vsel %vm512, %v554, 0.0
    %563 = vadd.xlane.f32.xlu0 %v562
    %v564 = vpop.xlane.xlu0 %563
    %v565 = vsel %vm512, %v555, 0.0
    %566 = vadd.xlane.f32.xlu0 %v565
    %v567 = vpop.xlane.xlu0 %566
    %v568 = vsel %vm512, %v556, 0.0
    %569 = vadd.xlane.f32.xlu0 %v568
    %v570 = vpop.xlane.xlu0 %569
    %v571 = vsel %vm512, %v557, 0.0
    %572 = vadd.xlane.f32.xlu0 %v571
    %v573 = vpop.xlane.xlu0 %572
    %v574 = vsel %vm512, %v558, 0.0
    %575 = vadd.xlane.f32.xlu0 %v574
    %v576 = vpop.xlane.xlu0 %575
    %v577 = vsel %vm512, %v559, 0.0
    %578 = vadd.xlane.f32.xlu0 %v577
    %v579 = vpop.xlane.xlu0 %578
    %v580 = vsel %vm512, %v560, 0.0
    %581 = vadd.xlane.f32.xlu0 %v580
    %v582 = vpop.xlane.xlu0 %581
    %v583 = vsel %vm512, %v561, 0.0
    %584 = vadd.xlane.f32.xlu0 %v583
    %v585 = vpop.xlane.xlu0 %584
    %v586 = vmul.f32 %v564, %v537
    %v587 = vmul.f32 %v567, %v537
    %v588 = vmul.f32 %v570, %v537
    %v589 = vmul.f32 %v573, %v537
    %v590 = vmul.f32 %v576, %v537
    %v591 = vmul.f32 %v579, %v537
    %v592 = vmul.f32 %v582, %v537
    %v593 = vmul.f32 %v585, %v537
    %v594 = vadd.f32 %v586, 1e-05
    %v595 = vadd.f32 %v587, 1e-05
    %v596 = vadd.f32 %v588, 1e-05
    %v597 = vadd.f32 %v589, 1e-05
    %v598 = vadd.f32 %v590, 1e-05
    %v599 = vadd.f32 %v591, 1e-05
    %v600 = vadd.f32 %v592, 1e-05
    %v601 = vadd.f32 %v593, 1e-05
    %v602 = vrsqrt.pop %v594
    %v603 = vrsqrt.pop %v595
    %v604 = vrsqrt.pop %v596
    %v605 = vrsqrt.pop %v597
    %v606 = vrsqrt.pop %v598
    %v607 = vrsqrt.pop %v599
    %v608 = vrsqrt.pop %v600
    %v609 = vrsqrt.pop %v601
    %v610 = vmul.f32 %v546, %v602
    %v611 = vmul.f32 %v547, %v603
    %v612 = vmul.f32 %v548, %v604
    %v613 = vmul.f32 %v549, %v605
    %v614 = vmul.f32 %v550, %v606
    %v615 = vmul.f32 %v551, %v607
    %v616 = vmul.f32 %v552, %v608
    %v617 = vmul.f32 %v553, %v609
    %v618 = vld [vmem:[%s2] sm:$0xff]
    %v619 = vld [vmem:[%s2 + $0x8] sm:$0xff]
    %v620 = vld [vmem:[%s2 + $0x10] sm:$0xff]
    %v621 = vld [vmem:[%s2 + $0x18] sm:$0xff]
    %v622 = vld [vmem:[%s2 + $0x20] sm:$0xff]
    %v623 = vld [vmem:[%s2 + $0x28] sm:$0xff]
    %v624 = vld [vmem:[%s2 + $0x30] sm:$0xff]
    %v625 = vld [vmem:[%s2 + $0x38] sm:$0xff]
    %627 = vset.pattern.permute.xlu0 0
    %628 = vperm.xlu0 %627, %v618
    %v629 = vpop.permute.xlu0 %628
    %632 = vset.pattern.permute.xlu0 0
    %633 = vperm.xlu0 %632, %v619
    %v634 = vpop.permute.xlu0 %633
    %637 = vset.pattern.permute.xlu0 0
    %638 = vperm.xlu0 %637, %v620
    %v639 = vpop.permute.xlu0 %638
    %642 = vset.pattern.permute.xlu0 0
    %643 = vperm.xlu0 %642, %v621
    %v644 = vpop.permute.xlu0 %643
    %647 = vset.pattern.permute.xlu0 0
    %648 = vperm.xlu0 %647, %v622
    %v649 = vpop.permute.xlu0 %648
    %652 = vset.pattern.permute.xlu0 0
    %653 = vperm.xlu0 %652, %v623
    %v654 = vpop.permute.xlu0 %653
    %657 = vset.pattern.permute.xlu0 0
    %658 = vperm.xlu0 %657, %v624
    %v659 = vpop.permute.xlu0 %658
    %662 = vset.pattern.permute.xlu0 0
    %663 = vperm.xlu0 %662, %v625
    %v664 = vpop.permute.xlu0 %663
    %v666 = vmul.f32 %v610, %v629
    %v667 = vmul.f32 %v611, %v634
    %v668 = vmul.f32 %v612, %v639
    %v669 = vmul.f32 %v613, %v644
    %v670 = vmul.f32 %v614, %v649
    %v671 = vmul.f32 %v615, %v654
    %v672 = vmul.f32 %v616, %v659
    %v673 = vmul.f32 %v617, %v664
    %v674 = vld [vmem:[%s3] sm:$0xff]
    %v675 = vld [vmem:[%s3 + $0x8] sm:$0xff]
    %v676 = vld [vmem:[%s3 + $0x10] sm:$0xff]
    %v677 = vld [vmem:[%s3 + $0x18] sm:$0xff]
    %v678 = vld [vmem:[%s3 + $0x20] sm:$0xff]
    %v679 = vld [vmem:[%s3 + $0x28] sm:$0xff]
    %v680 = vld [vmem:[%s3 + $0x30] sm:$0xff]
    %v681 = vld [vmem:[%s3 + $0x38] sm:$0xff]
    %683 = vset.pattern.permute.xlu0 0
    %684 = vperm.xlu0 %683, %v674
    %v685 = vpop.permute.xlu0 %684
    %688 = vset.pattern.permute.xlu0 0
    %689 = vperm.xlu0 %688, %v675
    %v690 = vpop.permute.xlu0 %689
    %693 = vset.pattern.permute.xlu0 0
    %694 = vperm.xlu0 %693, %v676
    %v695 = vpop.permute.xlu0 %694
    %698 = vset.pattern.permute.xlu0 0
    %699 = vperm.xlu0 %698, %v677
    %v700 = vpop.permute.xlu0 %699
    %703 = vset.pattern.permute.xlu0 0
    %704 = vperm.xlu0 %703, %v678
    %v705 = vpop.permute.xlu0 %704
    %708 = vset.pattern.permute.xlu0 0
    %709 = vperm.xlu0 %708, %v679
    %v710 = vpop.permute.xlu0 %709
    %713 = vset.pattern.permute.xlu0 0
    %714 = vperm.xlu0 %713, %v680
    %v715 = vpop.permute.xlu0 %714
    %718 = vset.pattern.permute.xlu0 0
    %719 = vperm.xlu0 %718, %v681
    %v720 = vpop.permute.xlu0 %719
    %v722 = vadd.f32 %v666, %v685
    %v723 = vadd.f32 %v667, %v690
    %v724 = vadd.f32 %v668, %v695
    %v725 = vadd.f32 %v669, %v700
    %v726 = vadd.f32 %v670, %v705
    %v727 = vadd.f32 %v671, %v710
    %v728 = vadd.f32 %v672, %v715
    %v729 = vadd.f32 %v673, %v720
    %vm730 = vcmp.gt.f32.partialorder %v722, 0.0
    %vm731 = vcmp.gt.f32.partialorder %v723, 0.0
    %vm732 = vcmp.gt.f32.partialorder %v724, 0.0
    %vm733 = vcmp.gt.f32.partialorder %v725, 0.0
    %vm734 = vcmp.gt.f32.partialorder %v726, 0.0
    %vm735 = vcmp.gt.f32.partialorder %v727, 0.0
    %vm736 = vcmp.gt.f32.partialorder %v728, 0.0
    %vm737 = vcmp.gt.f32.partialorder %v729, 0.0
    %v738 = vmul.f32 %v722, 0.2
    %v739 = vmul.f32 %v723, 0.2
    %v740 = vmul.f32 %v724, 0.2
    %v741 = vmul.f32 %v725, 0.2
    %v742 = vmul.f32 %v726, 0.2
    %v743 = vmul.f32 %v727, 0.2
    %v744 = vmul.f32 %v728, 0.2
    %v745 = vmul.f32 %v729, 0.2
    %v746 = vsel %vm730, %v722, %v738
    %v747 = vsel %vm731, %v723, %v739
    %v748 = vsel %vm732, %v724, %v740
    %v749 = vsel %vm733, %v725, %v741
    %v750 = vsel %vm734, %v726, %v742
    %v751 = vsel %vm735, %v727, %v743
    %v752 = vsel %vm736, %v728, %v744
    %v753 = vsel %vm737, %v729, %v745
    %v754 = vld [vmem:[%s4] sm:$0xff]
    %v755 = vld [vmem:[%s4 + $0x8] sm:$0xff]
    %v756 = vld [vmem:[%s4 + $0x10] sm:$0xff]
    %v757 = vld [vmem:[%s4 + $0x18] sm:$0xff]
    %v758 = vld [vmem:[%s4 + $0x20] sm:$0xff]
    %v759 = vld [vmem:[%s4 + $0x28] sm:$0xff]
    %v760 = vld [vmem:[%s4 + $0x30] sm:$0xff]
    %v761 = vld [vmem:[%s4 + $0x38] sm:$0xff]
    %v762 = vmul.f32 %v746, %v754
    %v763 = vmul.f32 %v747, %v755
    %v764 = vmul.f32 %v748, %v756
    %v765 = vmul.f32 %v749, %v757
    %v766 = vmul.f32 %v750, %v758
    %v767 = vmul.f32 %v751, %v759
    %v768 = vmul.f32 %v752, %v760
    %v769 = vmul.f32 %v753, %v761
    %v770 = vsel %vm512, %v762, 0.0
    %v771 = vsel %vm512, %v763, 0.0
    %v772 = vadd.f32 %v770, %v771
    %v773 = vsel %vm512, %v764, 0.0
    %v774 = vadd.f32 %v772, %v773
    %v775 = vsel %vm512, %v765, 0.0
    %v776 = vadd.f32 %v774, %v775
    %v777 = vsel %vm512, %v766, 0.0
    %v778 = vadd.f32 %v776, %v777
    %v779 = vsel %vm512, %v767, 0.0
    %v780 = vadd.f32 %v778, %v779
    %v781 = vsel %vm512, %v768, 0.0
    %v782 = vadd.f32 %v780, %v781
    %v783 = vsel %vm512, %v769, 0.0
    %v784 = vadd.f32 %v782, %v783
    %v785 = vrot.slane %v784, 4
    %v786 = vadd.f32 %v784, %v785
    %v787 = vrot.slane %v786, 2
    %v788 = vadd.f32 %v786, %v787
    %v789 = vrot.slane %v788, 1
    %v790 = vadd.f32 %v788, %v789
    %v791 = vld [vmem:[%s6] sm:$0xff]
    %v792 = vld [vmem:[%s6 + $0x8] sm:$0xff]
    %v793 = vld [vmem:[%s6 + $0x10] sm:$0xff]
    %v794 = vld [vmem:[%s6 + $0x18] sm:$0xff]
    %v795 = vld [vmem:[#allocation2] sm:$0x1]
    %797 = vset.pattern.permute.xlu0 0
    %798 = vperm.xlu0 %797, %v795
    %v799 = vpop.permute.xlu0 %798
    %v801 = vlaneseq
    %v802 = vshrl.u32 %v801, 7
    %v803 = vsub.s32 0, %v802
    %v804 = vrot.slane %v799, %v803
    %v806 = vsel %vm512, %v790, 0
    %808 = vmatprep.subr.mxu0 0.0
    %809 = vmatpush1.msra.mxu0 %v791
    %810 = vmatprep.subr.mxu0 0.0
    %811 = vmatpush1.msra.mxu0 %v792
    %812 = vmatprep.subr.mxu0 0.0
    %813 = vmatpush1.msra.mxu0 %v793
    %814 = vmatprep.subr.mxu0 0.0
    %815 = vmatpush1.msra.mxu0 %v794
    %816 = vmatprep.subr.mxu0 0.0
    %817 = vmatpush1.msra.mxu0 0.0
    %818 = vmatprep.subr.mxu0 0.0
    %819 = vmatpush1.msra.mxu0 0.0
    %820 = vmatprep.subr.mxu0 0.0
    %821 = vmatpush1.msra.mxu0 0.0
    %822 = vmatprep.subr.mxu0 0.0
    %823 = vmatpush1.msra.mxu0 0.0
    %824 = vmatprep.subr.mxu0 0.0
    %825 = vmatpush1.msra.mxu0 0.0
    %826 = vmatprep.subr.mxu0 0.0
    %827 = vmatpush1.msra.mxu0 0.0
    %828 = vmatprep.subr.mxu0 0.0
    %829 = vmatpush1.msra.mxu0 0.0
    %830 = vmatprep.subr.mxu0 0.0
    %831 = vmatpush1.msra.mxu0 0.0
    %832 = vmatprep.subr.mxu0 0.0
    %833 = vmatpush1.msra.mxu0 0.0
    %834 = vmatprep.subr.mxu0 0.0
    %835 = vmatpush1.msra.mxu0 0.0
    %836 = vmatprep.subr.mxu0 0.0
    %837 = vmatpush1.msra.mxu0 0.0
    %838 = vmatprep.subr.mxu0 0.0
    %839 = vmatpush1.msra.mxu0 0.0
    %840 = vmatprep.subr.mxu0 0.0
    %841 = vmatpush1.msra.mxu0 0.0
    %842 = vmatprep.subr.mxu0 0.0
    %843 = vmatpush1.msra.mxu0 0.0
    %844 = vmatprep.subr.mxu0 0.0
    %845 = vmatpush1.msra.mxu0 0.0
    %846 = vmatprep.subr.mxu0 0.0
    %847 = vmatpush1.msra.mxu0 0.0
    %848 = vmatprep.subr.mxu0 0.0
    %849 = vmatpush1.msra.mxu0 0.0
    %850 = vmatprep.subr.mxu0 0.0
    %851 = vmatpush1.msra.mxu0 0.0
    %852 = vmatprep.subr.mxu0 0.0
    %853 = vmatpush1.msra.mxu0 0.0
    %854 = vmatprep.subr.mxu0 0.0
    %855 = vmatpush1.msra.mxu0 0.0
    %856 = vmatprep.subr.mxu0 0.0
    %857 = vmatpush1.msra.mxu0 0.0
    %858 = vmatprep.subr.mxu0 0.0
    %859 = vmatpush1.msra.mxu0 0.0
    %860 = vmatprep.subr.mxu0 0.0
    %861 = vmatpush1.msra.mxu0 0.0
    %862 = vmatprep.subr.mxu0 0.0
    %863 = vmatpush1.msra.mxu0 0.0
    %864 = vmatprep.subr.mxu0 0.0
    %865 = vmatpush1.msra.mxu0 0.0
    %866 = vmatprep.subr.mxu0 0.0
    %867 = vmatpush1.msra.mxu0 0.0
    %868 = vmatprep.subr.mxu0 0.0
    %869 = vmatpush1.msra.mxu0 0.0
    %870 = vmatprep.subr.mxu0 0.0
    %871 = vmatpush1.msra.mxu0 0.0
    %872 = vmatprep.mubr.f32.mxu0 0.0
    %873 = vmatmul.mubr.f32.gmra.mrb[0].mxu0 %v806
    %v874 = vpop.f32.mrb[0].mxu0
    %v875 = vadd.f32 %v804, %v874
    %v876 = vpop.f32.mrb[0].mxu0
    %877 = vdwg.mxu0
    %v878 = vsub.f32 0.0, %v875
    %v879 = vmul.f32 %v878, 1.442695
    %v880 = vpow.pop %v879
    %v881 = vadd.f32 %v880, 1.0
    %v882 = vrcp.pop %v881
    %vm883 = vcmask 8192
    %884 = vst.msk [vmem:[#allocation3] sm:$0x1] %vm883, %v882
    // Predicated region
    $region30: #{discriminator_forward.5} parent=1 // pred_check
      _
    $region31: #{discriminator_forward.5} parent=1 // pred_check_branch
      %886 = sbr.rel (0) target = $region33
    $region32: #{discriminator_forward.5} parent=1 // pred_region
      %s888 = ssub.s32 16, 16
      %889 = vsyncadd [#allocation4], %s888
      %s891 = sshll.u32 [#allocation3], 4
      %s892 = int_to_ptr.vmem [resolvable:$true] %s891
      %894 = dma.vmem_to_hbm [thread:$0]  %s892, 16, %s7, [#allocation4]
    $region33: #{discriminator_forward.5} parent=1 // pred_fallthru
      _
    // Predicated region
    $region34: #{discriminator_forward.5} parent=1 // pred_check
      _
    $region35: #{discriminator_forward.5} parent=1 // pred_check_branch
      %896 = sbr.rel (0) target = $region37
    $region36: #{discriminator_forward.5} parent=1 // pred_region
      %897 = dma.done [#allocation4], 16
    $region37: #{discriminator_forward.5} parent=1 // pred_fallthru
      _
    %898 = vsyncpa [#allocation4], 1

</llo_original>
